<compile_context>
chip_gen: v5e
topology: v5e:2x2
jax: 0.10.0
libtpu: 0.0.40
codegen_flags: <defaults>
</compile_context>

<pallas_src>
import numpy as np
import jax
import jax.numpy as jnp
from jax.experimental import pallas as pl
from jax.experimental.pallas import tpu as pltpu


# ----------------------------- Pallas kernel --------------------------------

def _aspp_fused_kernel(x_ref, t1_ref, t2_ref, t3_ref,
                       w11_ref, w9_ref, wcat_ref,
                       shifts_ref, bias_ref, o_ref):
    """One row-tile of the whole ASPP forward.

    x_ref   : (tm, Cin)      bf16   input rows (1x1 branch)
    t*_ref  : (tm, 9*Cin)    bf16   dilation-shifted taps, channel-packed
    w11_ref : (Cin, Cout)    bf16   BN-scale-folded 1x1 weights
    w9_ref  : (3, 9*Cin, Cout) bf16 BN-scale-folded dilated 3x3 weights
    wcat_ref: (4, Cout, Cout) bf16  BN-scale-folded final-conv slices (branches 0..3)
    shifts  : (4, Cout)      f32    per-branch BN shifts
    bias    : (1, Cout)      f32    shift_cat + image-pool-branch contribution
    o_ref   : (tm, Cout)     f32
    """
    shifts = shifts_ref[...]                                   # (4, Cout) f32

    def branch(inp, w, k):
        b = jnp.dot(inp, w, preferred_element_type=jnp.float32) + shifts[k]
        return b.astype(jnp.bfloat16)                          # feed next MXU stage

    b11 = branch(x_ref[...],  w11_ref[...], 0)
    b1  = branch(t1_ref[...], w9_ref[0],    1)
    b2  = branch(t2_ref[...], w9_ref[1],    2)
    b3  = branch(t3_ref[...], w9_ref[2],    3)

    acc  = jnp.dot(b11, wcat_ref[0], preferred_element_type=jnp.float32)
    acc += jnp.dot(b1,  wcat_ref[1], preferred_element_type=jnp.float32)
    acc += jnp.dot(b2,  wcat_ref[2], preferred_element_type=jnp.float32)
    acc += jnp.dot(b3,  wcat_ref[3], preferred_element_type=jnp.float32)

    o_ref[...] = acc + bias_ref[...]


# ------------------------------ JAX glue -------------------------------------

def _make_taps_packed(x_nhwc, d):
    """Channel-packed dilation taps: (N, H*W, 9*C), tap order (ky, kx, c)
    matching HWIO weight .reshape(9*C, Cout). Pure data rearrangement."""
    N, H, W, C = x_nhwc.shape
    xp = jnp.pad(x_nhwc, ((0, 0), (d, d), (d, d), (0, 0)))
    taps = [xp[:, ky * d:ky * d + H, kx * d:kx * d + W, :]
            for ky in range(3) for kx in range(3)]
    return jnp.concatenate(taps, axis=-1).reshape(N, H * W, 9 * C)


def _pick_tm(hw, n, cap=512):
    """Largest divisor of hw (<= cap, multiple of 8 or == hw) keeping >= 4 grid
    steps when possible (v7x: 2 TCs x >=2 pipelined iterations)."""
    divs = sorted((t for t in range(1, hw + 1) if hw % t == 0 and t <= cap),
                  reverse=True)
    for t in divs:
        if n * (hw // t) >= 4 and (t % 8 == 0 or t == hw):
            return t
    for t in divs:
        if t % 8 == 0 or t == hw:
            return t
    return divs[0]


def aspp_plus_forward(x_nchw, P, aspp, *, tm=None):
    N, C, H, W = x_nchw.shape
    HW = H * W
    cout = P['w11'].shape[-1]

    x = jnp.transpose(x_nchw, (0, 2, 3, 1)).astype(jnp.float32)       # NHWC
    x_rows = x.reshape(N, HW, C)

    if tm is None:
        tm = _pick_tm(HW, N)
    # TODO(synk): arbitrary H*W not divisible by tm would need row padding.
    assert HW % tm == 0

    # ---- host-side weight prep: fold BN scales into conv weights ----
    sc11, sh11 = P['bn11']
    w11s = (P['w11'] * sc11).astype(jnp.bfloat16)                      # (C, cout)
    w9s = jnp.stack([(w.reshape(9 * C, cout) * sc).astype(jnp.bfloat16)
                     for w, (sc, _) in zip(P['w33'], P['bn33'])])      # (3, 9C, cout)
    sccat, shcat = P['bncat']
    wcat_s = P['wcat'] * sccat                                         # (5*cout, cout)
    wcat4 = wcat_s[:4 * cout].reshape(4, cout, cout).astype(jnp.bfloat16)

    shifts = jnp.concatenate([sh11] + [sh for _, sh in P['bn33']],
                             axis=0).astype(jnp.float32)               # (4, cout)

    # ---- image-pool branch folded into a per-image bias (f32, exact) ----
    pooled = jnp.mean(x_rows, axis=1)                                  # (N, C)
    pooled = pooled @ P['w11'] * sc11 + sh11                           # conv11 + BN
    bias = shcat + pooled @ wcat_s[4 * cout:]                          # (N, cout)
    bias = bias.reshape(N, 1, cout).astype(jnp.float32)

    # ---- activations / taps (bf16 operands, f32 accumulation in-kernel) ----
    x_b = x_rows.astype(jnp.bfloat16)
    taps = [_make_taps_packed(x, d).astype(jnp.bfloat16) for d in aspp]

    row_spec = lambda last: pl.BlockSpec((None, tm, last), lambda n, i: (n, i, 0))
    const = lambda shape: pl.BlockSpec(shape, lambda n, i, _s=shape: (0,) * len(_s))

    out = pl.pallas_call(
        _aspp_fused_kernel,
        out_shape=jax.ShapeDtypeStruct((N, HW, cout), jnp.float32),
        grid=(N, HW // tm),
        in_specs=[
            row_spec(C),                                  # x rows
            row_spec(9 * C),                              # taps, dilation 1
            row_spec(9 * C),                              # taps, dilation 2
            row_spec(9 * C),                              # taps, dilation 3
            const((C, cout)),                             # w11 (scale-folded)
            const((3, 9 * C, cout)),                      # w33 (scale-folded)
            const((4, cout, cout)),                       # wcat slices (scale-folded)
            const((4, cout)),                             # per-branch shifts
            pl.BlockSpec((None, 1, cout), lambda n, i: (n, 0, 0)),  # per-image bias
        ],
        out_specs=row_spec(cout),
        compiler_params=pltpu.CompilerParams(
            dimension_semantics=("parallel", "parallel")),
    )(x_b, taps[0], taps[1], taps[2], w11s, w9s, wcat4, shifts, bias)

    return jnp.transpose(out.reshape(N, H, W, cout), (0, 3, 1, 2))     # NCHW


# --------------------------- parameter init ----------------------------------

def init_params(key, c_in, cout=256):
    k11, k1, k2, k3, kcat, kbn = jax.random.split(key, 6)
    bnkeys = jax.random.split(kbn, 5)

    def conv_w(k, shape):
        fan_in = 1
        for s in shape[:-1]:
            fan_in *= s
        return jax.random.normal(k, shape, jnp.float32) / jnp.sqrt(float(fan_in))

    def bn_params(k, ch=cout):
        kg, kb, km, kv = jax.random.split(k, 4)
        gamma = 1.0 + 0.1 * jax.random.normal(kg, (1, ch), jnp.float32)
        beta = 0.1 * jax.random.normal(kb, (1, ch), jnp.float32)
        mean = 0.1 * jax.random.normal(km, (1, ch), jnp.float32)
        var = 0.5 + jnp.abs(jax.random.normal(kv, (1, ch), jnp.float32))
        scale = gamma * jax.lax.rsqrt(var + 1e-5)
        shift = beta - mean * scale
        return scale, shift

    return {
        'w11': conv_w(k11, (c_in, cout)),
        'bn11': bn_params(bnkeys[0]),
        'w33': [conv_w(k, (3, 3, c_in, cout)) for k in (k1, k2, k3)],
        'bn33': [bn_params(bk) for bk in bnkeys[1:4]],
        'wcat': conv_w(kcat, (5 * cout, cout)),
        'bncat': bn_params(bnkeys[4]),
    }


# ------------------------- pure-JAX reference ---------------------------------

def ref_forward(x_nchw, P, aspp):
    x = jnp.transpose(x_nchw, (0, 2, 3, 1)).astype(jnp.float32)
    N, H, W, C = x.shape
    cout = P['w11'].shape[-1]
    hp = jax.lax.Precision.HIGHEST

    def bn(y, sc_sh):
        sc, sh = sc_sh
        return y * sc.reshape(1, 1, 1, -1) + sh.reshape(1, 1, 1, -1)

    branches = [bn(jnp.einsum('nhwc,co->nhwo', x, P['w11'], precision=hp),
                   P['bn11'])]
    for d, w, b in zip(aspp, P['w33'], P['bn33']):
        y = jax.lax.conv_general_dilated(
            x, w, window_strides=(1, 1), padding=[(d, d), (d, d)],
            rhs_dilation=(d, d),
            dimension_numbers=('NHWC', 'HWIO', 'NHWC'), precision=hp)
        branches.append(bn(y, b))
    pooled = jnp.mean(x, axis=(1, 2))
    pooled = jnp.einsum('nc,co->no', pooled, P['w11'], precision=hp)
    sc, sh = P['bn11']
    pooled = pooled * sc.reshape(1, -1) + sh.reshape(1, -1)
    branches.append(jnp.broadcast_to(pooled[:, None, None, :], (N, H, W, cout)))
    cat = jnp.concatenate(branches, axis=-1)
    out = bn(jnp.einsum('nhwf,fo->nhwo', cat, P['wcat'], precision=hp),
             P['bncat'])
    return jnp.transpose(out, (0, 3, 1, 2))


# --------------------------------- main ---------------------------------------

if __name__ == "__main__":
    N, C_in, H, W = 2, 8, 16, 16            # params.c[-1] = 8
    aspp = (2, 4, 6)                        # params.aspp

    key = jax.random.PRNGKey(0)
    kx, kp = jax.random.split(key)
    x = jax.random.normal(kx, (N, C_in, H, W), jnp.float32)
    P = init_params(kp, C_in)

    out = jax.block_until_ready(aspp_plus_forward(x, P, aspp))
    assert out.shape == (N, 256, H, W), out.shape

    ref = ref_forward(x, P, aspp)
    np.testing.assert_allclose(np.asarray(out), np.asarray(ref),
                               rtol=2e-2, atol=2e-2)
    print("KERNEL_OK")
</pallas_src>

<mosaic_0001>
module attributes {stable_mosaic.version = 11 : i64} {
  func.func @_aspp_fused_kernel(%arg0: i32, %arg1: i32, %arg2: memref<1x128x8xbf16, #tpu.memory_space<vmem>>, %arg3: memref<1x128x72xbf16, #tpu.memory_space<vmem>>, %arg4: memref<1x128x72xbf16, #tpu.memory_space<vmem>>, %arg5: memref<1x128x72xbf16, #tpu.memory_space<vmem>>, %arg6: memref<8x256xbf16, #tpu.memory_space<vmem>>, %arg7: memref<3x72x256xbf16, #tpu.memory_space<vmem>>, %arg8: memref<4x256x256xbf16, #tpu.memory_space<vmem>>, %arg9: memref<4x256xf32, #tpu.memory_space<vmem>>, %arg10: memref<1x1x256xf32, #tpu.memory_space<vmem>>, %arg11: memref<1x128x256xf32, #tpu.memory_space<vmem>>) attributes {dimension_semantics = [#tpu.dimension_semantics<parallel>, #tpu.dimension_semantics<parallel>], iteration_bounds = array<i64: 2, 2>, scalar_prefetch = 0 : i64, scratch_operands = 0 : i64, tpu.core_type = #tpu.core_type<tc>, window_params = [{transform_indices = @transform_0, window_bounds = array<i64: 1, 128, 8>}, {transform_indices = @transform_1, window_bounds = array<i64: 1, 128, 72>}, {transform_indices = @transform_2, window_bounds = array<i64: 1, 128, 72>}, {transform_indices = @transform_3, window_bounds = array<i64: 1, 128, 72>}, {pipeline_mode = #tpu.pipeline_mode<synchronous>, transform_indices = @transform_4, window_bounds = array<i64: 8, 256>}, {pipeline_mode = #tpu.pipeline_mode<synchronous>, transform_indices = @transform_5, window_bounds = array<i64: 3, 72, 256>}, {pipeline_mode = #tpu.pipeline_mode<synchronous>, transform_indices = @transform_6, window_bounds = array<i64: 4, 256, 256>}, {pipeline_mode = #tpu.pipeline_mode<synchronous>, transform_indices = @transform_7, window_bounds = array<i64: 4, 256>}, {transform_indices = @transform_8, window_bounds = array<i64: 1, 1, 256>}, {transform_indices = @transform_9, window_bounds = array<i64: 1, 128, 256>}]} {
    %c0 = arith.constant 0 : index
    %c0_0 = arith.constant 0 : index
    %0 = vector.load %arg9[%c0, %c0_0] : memref<4x256xf32, #tpu.memory_space<vmem>>, vector<4x256xf32>
    %c0_1 = arith.constant 0 : index
    %c0_2 = arith.constant 0 : index
    %c0_3 = arith.constant 0 : index
    %1 = vector.load %arg2[%c0_1, %c0_2, %c0_3] : memref<1x128x8xbf16, #tpu.memory_space<vmem>>, vector<1x128x8xbf16>
    %2 = vector.shape_cast %1 : vector<1x128x8xbf16> to vector<128x8xbf16>
    %c0_4 = arith.constant 0 : index
    %c0_5 = arith.constant 0 : index
    %3 = vector.load %arg6[%c0_4, %c0_5] : memref<8x256xbf16, #tpu.memory_space<vmem>>, vector<8x256xbf16>
    %cst = arith.constant dense<0.000000e+00> : vector<128x256xf32>
    %4 = tpu.matmul %2, %3, %cst {dimension_numbers = #tpu.dot_dimension_numbers<[1], [0], [0], [1], [0, 0, 1, 1], [], []>} : vector<128x8xbf16>, vector<8x256xbf16>, vector<128x256xf32> -> vector<128x256xf32>
    %5 = vector.extract_strided_slice %0 {offsets = [0, 0], sizes = [1, 256], strides = [1, 1]} : vector<4x256xf32> to vector<1x256xf32>
    %6 = vector.shape_cast %5 : vector<1x256xf32> to vector<256xf32>
    %7 = vector.shape_cast %6 : vector<256xf32> to vector<1x256xf32>
    %8 = vector.broadcast %7 : vector<1x256xf32> to vector<128x256xf32>
    %9 = arith.addf %4, %8 : vector<128x256xf32>
    %10 = arith.truncf %9 : vector<128x256xf32> to vector<128x256xbf16>
    %c0_6 = arith.constant 0 : index
    %c0_7 = arith.constant 0 : index
    %c0_8 = arith.constant 0 : index
    %11 = vector.load %arg3[%c0_6, %c0_7, %c0_8] : memref<1x128x72xbf16, #tpu.memory_space<vmem>>, vector<1x128x72xbf16>
    %12 = vector.shape_cast %11 : vector<1x128x72xbf16> to vector<128x72xbf16>
    %c0_9 = arith.constant 0 : index
    %c0_10 = arith.constant 0 : index
    %c0_11 = arith.constant 0 : index
    %13 = vector.load %arg7[%c0_9, %c0_10, %c0_11] : memref<3x72x256xbf16, #tpu.memory_space<vmem>>, vector<1x72x256xbf16>
    %14 = vector.shape_cast %13 : vector<1x72x256xbf16> to vector<72x256xbf16>
    %cst_12 = arith.constant dense<0.000000e+00> : vector<128x256xf32>
    %15 = tpu.matmul %12, %14, %cst_12 {dimension_numbers = #tpu.dot_dimension_numbers<[1], [0], [0], [1], [0, 0, 1, 1], [], []>} : vector<128x72xbf16>, vector<72x256xbf16>, vector<128x256xf32> -> vector<128x256xf32>
    %16 = vector.extract_strided_slice %0 {offsets = [1, 0], sizes = [1, 256], strides = [1, 1]} : vector<4x256xf32> to vector<1x256xf32>
    %17 = vector.shape_cast %16 : vector<1x256xf32> to vector<256xf32>
    %18 = vector.shape_cast %17 : vector<256xf32> to vector<1x256xf32>
    %19 = vector.broadcast %18 : vector<1x256xf32> to vector<128x256xf32>
    %20 = arith.addf %15, %19 : vector<128x256xf32>
    %21 = arith.truncf %20 : vector<128x256xf32> to vector<128x256xbf16>
    %c0_13 = arith.constant 0 : index
    %c0_14 = arith.constant 0 : index
    %c0_15 = arith.constant 0 : index
    %22 = vector.load %arg4[%c0_13, %c0_14, %c0_15] : memref<1x128x72xbf16, #tpu.memory_space<vmem>>, vector<1x128x72xbf16>
    %23 = vector.shape_cast %22 : vector<1x128x72xbf16> to vector<128x72xbf16>
    %c1 = arith.constant 1 : index
    %c0_16 = arith.constant 0 : index
    %c0_17 = arith.constant 0 : index
    %24 = vector.load %arg7[%c1, %c0_16, %c0_17] : memref<3x72x256xbf16, #tpu.memory_space<vmem>>, vector<1x72x256xbf16>
    %25 = vector.shape_cast %24 : vector<1x72x256xbf16> to vector<72x256xbf16>
    %cst_18 = arith.constant dense<0.000000e+00> : vector<128x256xf32>
    %26 = tpu.matmul %23, %25, %cst_18 {dimension_numbers = #tpu.dot_dimension_numbers<[1], [0], [0], [1], [0, 0, 1, 1], [], []>} : vector<128x72xbf16>, vector<72x256xbf16>, vector<128x256xf32> -> vector<128x256xf32>
    %27 = vector.extract_strided_slice %0 {offsets = [2, 0], sizes = [1, 256], strides = [1, 1]} : vector<4x256xf32> to vector<1x256xf32>
    %28 = vector.shape_cast %27 : vector<1x256xf32> to vector<256xf32>
    %29 = vector.shape_cast %28 : vector<256xf32> to vector<1x256xf32>
    %30 = vector.broadcast %29 : vector<1x256xf32> to vector<128x256xf32>
    %31 = arith.addf %26, %30 : vector<128x256xf32>
    %32 = arith.truncf %31 : vector<128x256xf32> to vector<128x256xbf16>
    %c0_19 = arith.constant 0 : index
    %c0_20 = arith.constant 0 : index
    %c0_21 = arith.constant 0 : index
    %33 = vector.load %arg5[%c0_19, %c0_20, %c0_21] : memref<1x128x72xbf16, #tpu.memory_space<vmem>>, vector<1x128x72xbf16>
    %34 = vector.shape_cast %33 : vector<1x128x72xbf16> to vector<128x72xbf16>
    %c2 = arith.constant 2 : index
    %c0_22 = arith.constant 0 : index
    %c0_23 = arith.constant 0 : index
    %35 = vector.load %arg7[%c2, %c0_22, %c0_23] : memref<3x72x256xbf16, #tpu.memory_space<vmem>>, vector<1x72x256xbf16>
    %36 = vector.shape_cast %35 : vector<1x72x256xbf16> to vector<72x256xbf16>
    %cst_24 = arith.constant dense<0.000000e+00> : vector<128x256xf32>
    %37 = tpu.matmul %34, %36, %cst_24 {dimension_numbers = #tpu.dot_dimension_numbers<[1], [0], [0], [1], [0, 0, 1, 1], [], []>} : vector<128x72xbf16>, vector<72x256xbf16>, vector<128x256xf32> -> vector<128x256xf32>
    %38 = vector.extract_strided_slice %0 {offsets = [3, 0], sizes = [1, 256], strides = [1, 1]} : vector<4x256xf32> to vector<1x256xf32>
    %39 = vector.shape_cast %38 : vector<1x256xf32> to vector<256xf32>
    %40 = vector.shape_cast %39 : vector<256xf32> to vector<1x256xf32>
    %41 = vector.broadcast %40 : vector<1x256xf32> to vector<128x256xf32>
    %42 = arith.addf %37, %41 : vector<128x256xf32>
    %43 = arith.truncf %42 : vector<128x256xf32> to vector<128x256xbf16>
    %c0_25 = arith.constant 0 : index
    %c0_26 = arith.constant 0 : index
    %c0_27 = arith.constant 0 : index
    %44 = vector.load %arg8[%c0_25, %c0_26, %c0_27] : memref<4x256x256xbf16, #tpu.memory_space<vmem>>, vector<1x256x256xbf16>
    %45 = vector.shape_cast %44 : vector<1x256x256xbf16> to vector<256x256xbf16>
    %cst_28 = arith.constant dense<0.000000e+00> : vector<128x256xf32>
    %46 = tpu.matmul %10, %45, %cst_28 {dimension_numbers = #tpu.dot_dimension_numbers<[1], [0], [0], [1], [0, 0, 1, 1], [], []>} : vector<128x256xbf16>, vector<256x256xbf16>, vector<128x256xf32> -> vector<128x256xf32>
    %c1_29 = arith.constant 1 : index
    %c0_30 = arith.constant 0 : index
    %c0_31 = arith.constant 0 : index
    %47 = vector.load %arg8[%c1_29, %c0_30, %c0_31] : memref<4x256x256xbf16, #tpu.memory_space<vmem>>, vector<1x256x256xbf16>
    %48 = vector.shape_cast %47 : vector<1x256x256xbf16> to vector<256x256xbf16>
    %cst_32 = arith.constant dense<0.000000e+00> : vector<128x256xf32>
    %49 = tpu.matmul %21, %48, %cst_32 {dimension_numbers = #tpu.dot_dimension_numbers<[1], [0], [0], [1], [0, 0, 1, 1], [], []>} : vector<128x256xbf16>, vector<256x256xbf16>, vector<128x256xf32> -> vector<128x256xf32>
    %50 = arith.addf %46, %49 : vector<128x256xf32>
    %c2_33 = arith.constant 2 : index
    %c0_34 = arith.constant 0 : index
    %c0_35 = arith.constant 0 : index
    %51 = vector.load %arg8[%c2_33, %c0_34, %c0_35] : memref<4x256x256xbf16, #tpu.memory_space<vmem>>, vector<1x256x256xbf16>
    %52 = vector.shape_cast %51 : vector<1x256x256xbf16> to vector<256x256xbf16>
    %cst_36 = arith.constant dense<0.000000e+00> : vector<128x256xf32>
    %53 = tpu.matmul %32, %52, %cst_36 {dimension_numbers = #tpu.dot_dimension_numbers<[1], [0], [0], [1], [0, 0, 1, 1], [], []>} : vector<128x256xbf16>, vector<256x256xbf16>, vector<128x256xf32> -> vector<128x256xf32>
    %54 = arith.addf %50, %53 : vector<128x256xf32>
    %c3 = arith.constant 3 : index
    %c0_37 = arith.constant 0 : index
    %c0_38 = arith.constant 0 : index
    %55 = vector.load %arg8[%c3, %c0_37, %c0_38] : memref<4x256x256xbf16, #tpu.memory_space<vmem>>, vector<1x256x256xbf16>
    %56 = vector.shape_cast %55 : vector<1x256x256xbf16> to vector<256x256xbf16>
    %cst_39 = arith.constant dense<0.000000e+00> : vector<128x256xf32>
    %57 = tpu.matmul %43, %56, %cst_39 {dimension_numbers = #tpu.dot_dimension_numbers<[1], [0], [0], [1], [0, 0, 1, 1], [], []>} : vector<128x256xbf16>, vector<256x256xbf16>, vector<128x256xf32> -> vector<128x256xf32>
    %58 = arith.addf %54, %57 : vector<128x256xf32>
    %c0_40 = arith.constant 0 : index
    %c0_41 = arith.constant 0 : index
    %c0_42 = arith.constant 0 : index
    %59 = vector.load %arg10[%c0_40, %c0_41, %c0_42] : memref<1x1x256xf32, #tpu.memory_space<vmem>>, vector<1x1x256xf32>
    %60 = vector.shape_cast %59 : vector<1x1x256xf32> to vector<1x256xf32>
    %61 = vector.broadcast %60 : vector<1x256xf32> to vector<128x256xf32>
    %62 = arith.addf %58, %61 : vector<128x256xf32>
    %c0_43 = arith.constant 0 : index
    %c0_44 = arith.constant 0 : index
    %c0_45 = arith.constant 0 : index
    %63 = vector.load %arg11[%c0_43, %c0_44, %c0_45] : memref<1x128x256xf32, #tpu.memory_space<vmem>>, vector<1x128x256xf32>
    %64 = vector.shape_cast %63 : vector<1x128x256xf32> to vector<128x256xf32>
    %65 = vector.shape_cast %62 : vector<128x256xf32> to vector<1x128x256xf32>
    tpu.vector_store %arg11[%c0_43, %c0_44, %c0_45], %65 {strides = array<i32>} : memref<1x128x256xf32, #tpu.memory_space<vmem>>, vector<1x128x256xf32>,
    return
  }
  func.func @transform_0(%arg0: i32, %arg1: i32) -> (i32, i32, i32) {
    %c0_i32 = arith.constant 0 : i32
    %c0_i32_0 = arith.constant 0 : i32
    return %arg0, %arg1, %c0_i32 : i32, i32, i32
  }
  func.func @transform_1(%arg0: i32, %arg1: i32) -> (i32, i32, i32) {
    %c0_i32 = arith.constant 0 : i32
    %c0_i32_0 = arith.constant 0 : i32
    return %arg0, %arg1, %c0_i32 : i32, i32, i32
  }
  func.func @transform_2(%arg0: i32, %arg1: i32) -> (i32, i32, i32) {
    %c0_i32 = arith.constant 0 : i32
    %c0_i32_0 = arith.constant 0 : i32
    return %arg0, %arg1, %c0_i32 : i32, i32, i32
  }
  func.func @transform_3(%arg0: i32, %arg1: i32) -> (i32, i32, i32) {
    %c0_i32 = arith.constant 0 : i32
    %c0_i32_0 = arith.constant 0 : i32
    return %arg0, %arg1, %c0_i32 : i32, i32, i32
  }
  func.func @transform_4(%arg0: i32, %arg1: i32) -> (i32, i32) {
    %c0_i32 = arith.constant 0 : i32
    %c0_i32_0 = arith.constant 0 : i32
    %c0_i32_1 = arith.constant 0 : i32
    return %c0_i32, %c0_i32_0 : i32, i32
  }
  func.func @transform_5(%arg0: i32, %arg1: i32) -> (i32, i32, i32) {
    %c0_i32 = arith.constant 0 : i32
    %c0_i32_0 = arith.constant 0 : i32
    %c0_i32_1 = arith.constant 0 : i32
    %c0_i32_2 = arith.constant 0 : i32
    return %c0_i32, %c0_i32_0, %c0_i32_1 : i32, i32, i32
  }
  func.func @transform_6(%arg0: i32, %arg1: i32) -> (i32, i32, i32) {
    %c0_i32 = arith.constant 0 : i32
    %c0_i32_0 = arith.constant 0 : i32
    %c0_i32_1 = arith.constant 0 : i32
    %c0_i32_2 = arith.constant 0 : i32
    return %c0_i32, %c0_i32_0, %c0_i32_1 : i32, i32, i32
  }
  func.func @transform_7(%arg0: i32, %arg1: i32) -> (i32, i32) {
    %c0_i32 = arith.constant 0 : i32
    %c0_i32_0 = arith.constant 0 : i32
    %c0_i32_1 = arith.constant 0 : i32
    return %c0_i32, %c0_i32_0 : i32, i32
  }
  func.func @transform_8(%arg0: i32, %arg1: i32) -> (i32, i32, i32) {
    %c0_i32 = arith.constant 0 : i32
    %c0_i32_0 = arith.constant 0 : i32
    %c0_i32_1 = arith.constant 0 : i32
    return %arg0, %c0_i32, %c0_i32_0 : i32, i32, i32
  }
  func.func @transform_9(%arg0: i32, %arg1: i32) -> (i32, i32, i32) {
    %c0_i32 = arith.constant 0 : i32
    %c0_i32_0 = arith.constant 0 : i32
    return %arg0, %arg1, %c0_i32 : i32, i32, i32
  }
}

</mosaic_0001>

<llo_original>
// kernel: tpu_custom_call.1
$region0: #{tpu_custom_call.1}
  #allocation0 [shape = 'u32[]', space=smem, size = 0x4, offset = 0x4, fixed_abs, tag = 'smem constant byte address 0x4 - core index']
  #allocation1 [shape = 'u32[72,128]{1,0:T(1,128)}', space=vmem, size = 0x9000, scoped, tag = 'internal scratch']
  %s0 = inlined_call_operand.vmem [shape: bf16[2,256,8], index: 0, kind: input, shape index: {}]
  %s1 = inlined_call_operand.vmem [shape: bf16[2,256,72], index: 1, kind: input, shape index: {}]
  %s2 = inlined_call_operand.vmem [shape: bf16[2,256,72], index: 2, kind: input, shape index: {}]
  %s3 = inlined_call_operand.vmem [shape: bf16[2,256,72], index: 3, kind: input, shape index: {}]
  %s4 = inlined_call_operand.vmem [shape: bf16[8,256], index: 4, kind: input, shape index: {}]
  %s5 = inlined_call_operand.vmem [shape: bf16[3,72,256], index: 5, kind: input, shape index: {}]
  %s6 = inlined_call_operand.hbm [shape: bf16[4,256,256], index: 6, kind: input, shape index: {}]
  %s7 = inlined_call_operand.vmem [shape: f32[4,256], index: 7, kind: input, shape index: {}]
  %s8 = inlined_call_operand.vmem [shape: f32[2,1,256], index: 8, kind: input, shape index: {}]
  %s9 = inlined_call_operand.hbm [shape: f32[2,256,256], index: 9, kind: output, shape index: {}]
  %s10 = sld [smem:[#allocation0]]
  $region73: #{tpu_custom_call.1} parent=0
    _
  %s12 = ssub.s32 1, %s10
  %s13 = scalar_select 0, %s12, %s10
  $region1: #{tpu_custom_call.1} parent=0
    #allocation2 [shape = 'u8[524288]{0}', space=vmem, size = 0x80000, scoped, tag = 'input window, operand 6, single buffered']
    #allocation3 [shape = 's32[2]{0}', space=sflag, size = 0x8, scoped, tag = 'scoped memory for tpu_custom_call.1']
    #allocation4 [shape = 's32[2]{0}', space=sflag, size = 0x8, scoped, tag = 'scoped memory for tpu_custom_call.1']
    #allocation5 [shape = 'u8[262144]{0}', space=vmem, size = 0x40000, scoped, tag = 'output window, operand 0']
    %14 = vsyncpa [#allocation3], 0
    %15 = vsyncpa [#allocation4], 0
    %s16 = scalar_lea.sflag [#allocation4], 1
    %17 = vsyncpa %s16, 0
    loop: start=0, step=1, limit=6
    $region2: #{tpu_custom_call.1} parent=1 // loop_pre_header
      _
    $region3: #{tpu_custom_call.1} parent=1 // loop_header
      %s19 = sphi 0, %s23
      %p20 = scmp.ge.s32.totalorder %s19, 6
      %s26 = sphi 0, %s38
      %s27 = sphi 0, %s34
      %s28 = sphi 0, %s26
      %s29 = sphi 0, %s27
      %s30 = sphi 0, %s28
      %s31 = sphi 0, %s29
      %s43 = sphi 0, %s45
      %s46 = sphi 0, %s43
      %s47 = sphi 0, %s46
      %s63 = sphi 0, %s47
      %s71 = sphi 0, %s73
      %s74 = sphi 0, %s71
      %s75 = sphi 0, %s74
      %s91 = sphi 0, %s75
      %s99 = sphi 0, %s101
      %s102 = sphi 0, %s99
      %s103 = sphi 0, %s102
      %s119 = sphi 0, %s103
      %s127 = sphi 0, %s129
      %s130 = sphi 0, %s127
      %s131 = sphi 0, %s130
      %s147 = sphi 0, %s131
      %s151 = sphi 0, %s151
      %s153 = sphi 0, %s151
      %s154 = sphi 0, %s153
      %s168 = sphi 0, %s154
      %s172 = sphi 0, %s172
      %s174 = sphi 0, %s172
      %s175 = sphi 0, %s174
      %s189 = sphi 0, %s175
      %s193 = sphi 0, %s193
      %s195 = sphi 0, %s193
      %s196 = sphi 0, %s195
      %s210 = sphi 0, %s196
      %s214 = sphi 0, %s214
      %s216 = sphi 0, %s214
      %s217 = sphi 0, %s216
      %s231 = sphi 0, %s217
      %s237 = sphi 0, %s239
      %s240 = sphi 0, %s237
      %s241 = sphi 0, %s240
      %s257 = sphi 0, %s241
      %s265 = sphi 0, %s267
      %s268 = sphi 0, %s265
      %s269 = sphi 0, %s268
      %s285 = sphi 0, %s269
    $region4: #{tpu_custom_call.1} parent=1 // loop_header_branch
      %22 = sbr.rel (%p20) target = $region8
    $region5: #{tpu_custom_call.1} parent=1 // loop_body
      %s24 = ssub.s32 %s19, 1
      %s25 = ssub.s32 %s19, 2
      %s32 = sadd.s32 1, %s27
      %p33 = scmp.ge.s32.totalorder %s32, 2
      %s34 = scalar_select %p33, 0, %s32
      %s35 = sadd.s32 1, %s26
      %s36 = scalar_select %p33, %s35, %s26
      %p37 = scmp.ge.s32.totalorder %s36, 2
      %s38 = scalar_select %p37, 0, %s36
      %s39 = ssub.s32 %s26, %s38
      %s40 = ssub.s32 %s27, %s34
      %s41 = sor.u32 %s39, %s40
      %p42 = scmp.eq.s32.totalorder %s41, 0
      %s44 = sadd.s32 %s43, 1
      %s45 = scalar_select %p42, %s43, %s44
      %p48 = pneg %p42
      %p49 = scmp.eq.s32.totalorder %s19, 3
      %p50 = por %p48, %p49
      %p51 = scmp.ne.s32.totalorder %s43, %s46
      %p52 = scmp.eq.s32.totalorder %s19, 0
      %p53 = por %p51, %p52
      %p54 = scmp.ne.s32.totalorder %s43, %s46
      %p55 = scmp.eq.s32.totalorder %s24, 3
      %p56 = por %p54, %p55
      %p57 = scmp.ne.s32.totalorder %s46, %s47
      %p58 = scmp.eq.s32.totalorder %s24, 0
      %p59 = por %p57, %p58
      %p60 = scmp.ne.s32.totalorder %s46, %s47
      %p61 = scmp.eq.s32.totalorder %s25, 3
      %p62 = por %p60, %p61
      %p64 = scmp.ne.s32.totalorder %s47, %s63
      %p65 = scmp.eq.s32.totalorder %s25, 0
      %p66 = por %p64, %p65
      %s67 = ssub.s32 %s26, %s38
      %s68 = ssub.s32 %s27, %s34
      %s69 = sor.u32 %s67, %s68
      %p70 = scmp.eq.s32.totalorder %s69, 0
      %s72 = sadd.s32 %s71, 1
      %s73 = scalar_select %p70, %s71, %s72
      %p76 = pneg %p70
      %p77 = scmp.eq.s32.totalorder %s19, 3
      %p78 = por %p76, %p77
      %p79 = scmp.ne.s32.totalorder %s71, %s74
      %p80 = scmp.eq.s32.totalorder %s19, 0
      %p81 = por %p79, %p80
      %p82 = scmp.ne.s32.totalorder %s71, %s74
      %p83 = scmp.eq.s32.totalorder %s24, 3
      %p84 = por %p82, %p83
      %p85 = scmp.ne.s32.totalorder %s74, %s75
      %p86 = scmp.eq.s32.totalorder %s24, 0
      %p87 = por %p85, %p86
      %p88 = scmp.ne.s32.totalorder %s74, %s75
      %p89 = scmp.eq.s32.totalorder %s25, 3
      %p90 = por %p88, %p89
      %p92 = scmp.ne.s32.totalorder %s75, %s91
      %p93 = scmp.eq.s32.totalorder %s25, 0
      %p94 = por %p92, %p93
      %s95 = ssub.s32 %s26, %s38
      %s96 = ssub.s32 %s27, %s34
      %s97 = sor.u32 %s95, %s96
      %p98 = scmp.eq.s32.totalorder %s97, 0
      %s100 = sadd.s32 %s99, 1
      %s101 = scalar_select %p98, %s99, %s100
      %p104 = pneg %p98
      %p105 = scmp.eq.s32.totalorder %s19, 3
      %p106 = por %p104, %p105
      %p107 = scmp.ne.s32.totalorder %s99, %s102
      %p108 = scmp.eq.s32.totalorder %s19, 0
      %p109 = por %p107, %p108
      %p110 = scmp.ne.s32.totalorder %s99, %s102
      %p111 = scmp.eq.s32.totalorder %s24, 3
      %p112 = por %p110, %p111
      %p113 = scmp.ne.s32.totalorder %s102, %s103
      %p114 = scmp.eq.s32.totalorder %s24, 0
      %p115 = por %p113, %p114
      %p116 = scmp.ne.s32.totalorder %s102, %s103
      %p117 = scmp.eq.s32.totalorder %s25, 3
      %p118 = por %p116, %p117
      %p120 = scmp.ne.s32.totalorder %s103, %s119
      %p121 = scmp.eq.s32.totalorder %s25, 0
      %p122 = por %p120, %p121
      %s123 = ssub.s32 %s26, %s38
      %s124 = ssub.s32 %s27, %s34
      %s125 = sor.u32 %s123, %s124
      %p126 = scmp.eq.s32.totalorder %s125, 0
      %s128 = sadd.s32 %s127, 1
      %s129 = scalar_select %p126, %s127, %s128
      %p132 = pneg %p126
      %p133 = scmp.eq.s32.totalorder %s19, 3
      %p134 = por %p132, %p133
      %p135 = scmp.ne.s32.totalorder %s127, %s130
      %p136 = scmp.eq.s32.totalorder %s19, 0
      %p137 = por %p135, %p136
      %p138 = scmp.ne.s32.totalorder %s127, %s130
      %p139 = scmp.eq.s32.totalorder %s24, 3
      %p140 = por %p138, %p139
      %p141 = scmp.ne.s32.totalorder %s130, %s131
      %p142 = scmp.eq.s32.totalorder %s24, 0
      %p143 = por %p141, %p142
      %p144 = scmp.ne.s32.totalorder %s130, %s131
      %p145 = scmp.eq.s32.totalorder %s25, 3
      %p146 = por %p144, %p145
      %p148 = scmp.ne.s32.totalorder %s131, %s147
      %p149 = scmp.eq.s32.totalorder %s25, 0
      %p150 = por %p148, %p149
      %s152 = sadd.s32 %s151, 1
      %p155 = scmp.eq.s32.totalorder %s19, 3
      %p156 = scmp.ne.s32.totalorder %s151, %s153
      %p157 = scmp.eq.s32.totalorder %s19, 0
      %p158 = por %p156, %p157
      %p159 = scmp.ne.s32.totalorder %s151, %s153
      %p160 = scmp.eq.s32.totalorder %s24, 3
      %p161 = por %p159, %p160
      %p162 = scmp.ne.s32.totalorder %s153, %s154
      %p163 = scmp.eq.s32.totalorder %s24, 0
      %p164 = por %p162, %p163
      %p165 = scmp.ne.s32.totalorder %s153, %s154
      %p166 = scmp.eq.s32.totalorder %s25, 3
      %p167 = por %p165, %p166
      %p169 = scmp.ne.s32.totalorder %s154, %s168
      %p170 = scmp.eq.s32.totalorder %s25, 0
      %p171 = por %p169, %p170
      %s173 = sadd.s32 %s172, 1
      %p176 = scmp.eq.s32.totalorder %s19, 3
      %p177 = scmp.ne.s32.totalorder %s172, %s174
      %p178 = scmp.eq.s32.totalorder %s19, 0
      %p179 = por %p177, %p178
      %p180 = scmp.ne.s32.totalorder %s172, %s174
      %p181 = scmp.eq.s32.totalorder %s24, 3
      %p182 = por %p180, %p181
      %p183 = scmp.ne.s32.totalorder %s174, %s175
      %p184 = scmp.eq.s32.totalorder %s24, 0
      %p185 = por %p183, %p184
      %p186 = scmp.ne.s32.totalorder %s174, %s175
      %p187 = scmp.eq.s32.totalorder %s25, 3
      %p188 = por %p186, %p187
      %p190 = scmp.ne.s32.totalorder %s175, %s189
      %p191 = scmp.eq.s32.totalorder %s25, 0
      %p192 = por %p190, %p191
      %s194 = sadd.s32 %s193, 1
      %p197 = scmp.eq.s32.totalorder %s19, 3
      %p198 = scmp.ne.s32.totalorder %s193, %s195
      %p199 = scmp.eq.s32.totalorder %s19, 0
      %p200 = por %p198, %p199
      %p201 = scmp.ne.s32.totalorder %s193, %s195
      %p202 = scmp.eq.s32.totalorder %s24, 3
      %p203 = por %p201, %p202
      %p204 = scmp.ne.s32.totalorder %s195, %s196
      %p205 = scmp.eq.s32.totalorder %s24, 0
      %p206 = por %p204, %p205
      %p207 = scmp.ne.s32.totalorder %s195, %s196
      %p208 = scmp.eq.s32.totalorder %s25, 3
      %p209 = por %p207, %p208
      %p211 = scmp.ne.s32.totalorder %s196, %s210
      %p212 = scmp.eq.s32.totalorder %s25, 0
      %p213 = por %p211, %p212
      %s215 = sadd.s32 %s214, 1
      %p218 = scmp.eq.s32.totalorder %s19, 3
      %p219 = scmp.ne.s32.totalorder %s214, %s216
      %p220 = scmp.eq.s32.totalorder %s19, 0
      %p221 = por %p219, %p220
      %p222 = scmp.ne.s32.totalorder %s214, %s216
      %p223 = scmp.eq.s32.totalorder %s24, 3
      %p224 = por %p222, %p223
      %p225 = scmp.ne.s32.totalorder %s216, %s217
      %p226 = scmp.eq.s32.totalorder %s24, 0
      %p227 = por %p225, %p226
      %p228 = scmp.ne.s32.totalorder %s216, %s217
      %p229 = scmp.eq.s32.totalorder %s25, 3
      %p230 = por %p228, %p229
      %p232 = scmp.ne.s32.totalorder %s217, %s231
      %p233 = scmp.eq.s32.totalorder %s25, 0
      %p234 = por %p232, %p233
      %s235 = ssub.s32 %s26, %s38
      %p236 = scmp.eq.s32.totalorder %s235, 0
      %s238 = sadd.s32 %s237, 1
      %s239 = scalar_select %p236, %s237, %s238
      %p242 = pneg %p236
      %p243 = scmp.eq.s32.totalorder %s19, 3
      %p244 = por %p242, %p243
      %p245 = scmp.ne.s32.totalorder %s237, %s240
      %p246 = scmp.eq.s32.totalorder %s19, 0
      %p247 = por %p245, %p246
      %p248 = scmp.ne.s32.totalorder %s237, %s240
      %p249 = scmp.eq.s32.totalorder %s24, 3
      %p250 = por %p248, %p249
      %p251 = scmp.ne.s32.totalorder %s240, %s241
      %p252 = scmp.eq.s32.totalorder %s24, 0
      %p253 = por %p251, %p252
      %p254 = scmp.ne.s32.totalorder %s240, %s241
      %p255 = scmp.eq.s32.totalorder %s25, 3
      %p256 = por %p254, %p255
      %p258 = scmp.ne.s32.totalorder %s241, %s257
      %p259 = scmp.eq.s32.totalorder %s25, 0
      %p260 = por %p258, %p259
      %s261 = ssub.s32 %s26, %s38
      %s262 = ssub.s32 %s27, %s34
      %s263 = sor.u32 %s261, %s262
      %p264 = scmp.eq.s32.totalorder %s263, 0
      %s266 = sadd.s32 %s265, 1
      %s267 = scalar_select %p264, %s265, %s266
      %p270 = pneg %p264
      %p271 = scmp.eq.s32.totalorder %s19, 3
      %p272 = por %p270, %p271
      %p273 = scmp.ne.s32.totalorder %s265, %s268
      %p274 = scmp.eq.s32.totalorder %s19, 0
      %p275 = por %p273, %p274
      %p276 = scmp.ne.s32.totalorder %s265, %s268
      %p277 = scmp.eq.s32.totalorder %s24, 3
      %p278 = por %p276, %p277
      %p279 = scmp.ne.s32.totalorder %s268, %s269
      %p280 = scmp.eq.s32.totalorder %s24, 0
      %p281 = por %p279, %p280
      %p282 = scmp.ne.s32.totalorder %s268, %s269
      %p283 = scmp.eq.s32.totalorder %s25, 3
      %p284 = por %p282, %p283
      %p286 = scmp.ne.s32.totalorder %s269, %s285
      %p287 = scmp.eq.s32.totalorder %s25, 0
      %p288 = por %p286, %p287
      %p289 = scmp.le.s32.totalorder 1, %s19
      %p290 = scmp.lt.s32.totalorder %s19, 5
      %p291 = pnand %p289, %p290
      %p292 = pneg %p291
      // Predicated region
      $region9: #{tpu_custom_call.1} parent=5 // pred_check
        _
      $region10: #{tpu_custom_call.1} parent=5 // pred_check_branch
        %294 = sbr.rel (%p291) target = $region12
      $region11: #{tpu_custom_call.1} parent=5 // pred_region
        %s295 = ssub.s32 %s19, 1
        // Predicated region
        $region13: #{tpu_custom_call.1} parent=11 // pred_check
          %p296 = pneg %p164
        $region14: #{tpu_custom_call.1} parent=11 // pred_check_branch
          %298 = sbr.rel (%p296) target = $region16
        $region15: #{tpu_custom_call.1} parent=11 // pred_region
          _
        $region16: #{tpu_custom_call.1} parent=11 // pred_fallthru
          _
        // Predicated region
        $region17: #{tpu_custom_call.1} parent=11 // pred_check
          %p299 = pneg %p185
        $region18: #{tpu_custom_call.1} parent=11 // pred_check_branch
          %301 = sbr.rel (%p299) target = $region20
        $region19: #{tpu_custom_call.1} parent=11 // pred_region
          _
        $region20: #{tpu_custom_call.1} parent=11 // pred_fallthru
          _
        // Predicated region
        $region21: #{tpu_custom_call.1} parent=11 // pred_check
          %p302 = pneg %p206
        $region22: #{tpu_custom_call.1} parent=11 // pred_check_branch
          %304 = sbr.rel (%p302) target = $region24
        $region23: #{tpu_custom_call.1} parent=11 // pred_region
          %306 = vsyncadd [#allocation3], 0
          %s307 = sshll.u32 %s6, 4
          %s308 = int_to_ptr.hbm [resolvable:$true] %s307
          %s309 = sshll.u32 [#allocation2], 4
          %s310 = int_to_ptr.vmem [resolvable:$true] %s309
          %315 = dma.hbm_to_vmem [thread:$0]  %s308, 16384, %s310, [#allocation3], 128, 128, 8
        $region24: #{tpu_custom_call.1} parent=11 // pred_fallthru
          _
        // Predicated region
        $region25: #{tpu_custom_call.1} parent=11 // pred_check
          %p316 = pneg %p227
        $region26: #{tpu_custom_call.1} parent=11 // pred_check_branch
          %318 = sbr.rel (%p316) target = $region28
        $region27: #{tpu_custom_call.1} parent=11 // pred_region
          _
        $region28: #{tpu_custom_call.1} parent=11 // pred_fallthru
          _
      $region12: #{tpu_custom_call.1} parent=5 // pred_fallthru
        _
      %p319 = scmp.lt.s32.totalorder %s19, 4
      // Predicated region
      $region29: #{tpu_custom_call.1} parent=5 // pred_check
        %p320 = pneg %p319
      $region30: #{tpu_custom_call.1} parent=5 // pred_check_branch
        %322 = sbr.rel (%p320) target = $region32
      $region31: #{tpu_custom_call.1} parent=5 // pred_region
        // Predicated region
        $region33: #{tpu_custom_call.1} parent=31 // pred_check
          %p323 = pneg %p53
        $region34: #{tpu_custom_call.1} parent=31 // pred_check_branch
          %325 = sbr.rel (%p323) target = $region36
        $region35: #{tpu_custom_call.1} parent=31 // pred_region
          %s326 = smul.u32 16, %s27
          %p327 = scmp.lt.s32.totalorder %s26, 1
          %s328 = scalar_select %p327, %s26, 1
          %p329 = scmp.lt.s32.totalorder %s326, 31
          %s330 = scalar_select %p329, %s326, 31
          %s331 = smul.addr %s328, 32
          %s332 = sadd.s32 %s330, %s331
          %s333 = smul.addr %s332, 4
          %s334 = scalar_lea.vmem %s0, %s333
          %s335 = smul.u32 16, %s27
        $region36: #{tpu_custom_call.1} parent=31 // pred_fallthru
          _
        // Predicated region
        $region37: #{tpu_custom_call.1} parent=31 // pred_check
          %p336 = pneg %p81
        $region38: #{tpu_custom_call.1} parent=31 // pred_check_branch
          %338 = sbr.rel (%p336) target = $region40
        $region39: #{tpu_custom_call.1} parent=31 // pred_region
          %s339 = smul.u32 16, %s27
          %p340 = scmp.lt.s32.totalorder %s26, 1
          %s341 = scalar_select %p340, %s26, 1
          %p342 = scmp.lt.s32.totalorder %s339, 31
          %s343 = scalar_select %p342, %s339, 31
          %s344 = smul.addr %s341, 32
          %s345 = sadd.s32 %s343, %s344
          %s346 = smul.addr %s345, 4
          %s347 = scalar_lea.vmem %s1, %s346
          %s348 = smul.u32 16, %s27
        $region40: #{tpu_custom_call.1} parent=31 // pred_fallthru
          _
        // Predicated region
        $region41: #{tpu_custom_call.1} parent=31 // pred_check
          %p349 = pneg %p109
        $region42: #{tpu_custom_call.1} parent=31 // pred_check_branch
          %351 = sbr.rel (%p349) target = $region44
        $region43: #{tpu_custom_call.1} parent=31 // pred_region
          %s352 = smul.u32 16, %s27
          %p353 = scmp.lt.s32.totalorder %s26, 1
          %s354 = scalar_select %p353, %s26, 1
          %p355 = scmp.lt.s32.totalorder %s352, 31
          %s356 = scalar_select %p355, %s352, 31
          %s357 = smul.addr %s354, 32
          %s358 = sadd.s32 %s356, %s357
          %s359 = smul.addr %s358, 4
          %s360 = scalar_lea.vmem %s2, %s359
          %s361 = smul.u32 16, %s27
        $region44: #{tpu_custom_call.1} parent=31 // pred_fallthru
          _
        // Predicated region
        $region45: #{tpu_custom_call.1} parent=31 // pred_check
          %p362 = pneg %p137
        $region46: #{tpu_custom_call.1} parent=31 // pred_check_branch
          %364 = sbr.rel (%p362) target = $region48
        $region47: #{tpu_custom_call.1} parent=31 // pred_region
          %s365 = smul.u32 16, %s27
          %p366 = scmp.lt.s32.totalorder %s26, 1
          %s367 = scalar_select %p366, %s26, 1
          %p368 = scmp.lt.s32.totalorder %s365, 31
          %s369 = scalar_select %p368, %s365, 31
          %s370 = smul.addr %s367, 32
          %s371 = sadd.s32 %s369, %s370
          %s372 = smul.addr %s371, 4
          %s373 = scalar_lea.vmem %s3, %s372
          %s374 = smul.u32 16, %s27
        $region48: #{tpu_custom_call.1} parent=31 // pred_fallthru
          _
        // Predicated region
        $region49: #{tpu_custom_call.1} parent=31 // pred_check
          %p375 = pneg %p247
        $region50: #{tpu_custom_call.1} parent=31 // pred_check_branch
          %377 = sbr.rel (%p375) target = $region52
        $region51: #{tpu_custom_call.1} parent=31 // pred_region
          %p378 = scmp.lt.s32.totalorder %s26, 1
          %s379 = scalar_select %p378, %s26, 1
          %s380 = smul.addr %s379, 2
          %s381 = scalar_lea.vmem %s8, %s380
        $region52: #{tpu_custom_call.1} parent=31 // pred_fallthru
          _
      $region32: #{tpu_custom_call.1} parent=5 // pred_fallthru
        _
      %p382 = scmp.le.s32.totalorder 1, %s19
      %p383 = scmp.lt.s32.totalorder %s19, 5
      %p384 = pnand %p382, %p383
      %p385 = pneg %p384
      // Predicated region
      $region53: #{tpu_custom_call.1} parent=5 // pred_check
        _
      $region54: #{tpu_custom_call.1} parent=5 // pred_check_branch
        %387 = sbr.rel (%p384) target = $region56
      $region55: #{tpu_custom_call.1} parent=5 // pred_region
        %s388 = ssub.s32 %s19, 1
        // Predicated region
        $region57: #{tpu_custom_call.1} parent=55 // pred_check
          %p389 = pneg %p206
        $region58: #{tpu_custom_call.1} parent=55 // pred_check_branch
          %391 = sbr.rel (%p389) target = $region60
        $region59: #{tpu_custom_call.1} parent=55 // pred_region
          %393 = dma.done [#allocation3], 16384
        $region60: #{tpu_custom_call.1} parent=55 // pred_fallthru
          _
        %s394 = smul.u32 16, %s29
        %p395 = scmp.lt.s32.totalorder %s28, 1
        %s396 = scalar_select %p395, %s28, 1
        %p397 = scmp.lt.s32.totalorder %s394, 31
        %s398 = scalar_select %p397, %s394, 31
        %s399 = smul.addr %s396, 32
        %s400 = sadd.s32 %s398, %s399
        %s401 = smul.addr %s400, 4
        %s402 = scalar_lea.vmem %s0, %s401
        %p403 = pneg %p59
        %p404 = pneg %p56
        %s405 = smul.u32 16, %s29
        %p406 = scmp.lt.s32.totalorder %s28, 1
        %s407 = scalar_select %p406, %s28, 1
        %p408 = scmp.lt.s32.totalorder %s405, 31
        %s409 = scalar_select %p408, %s405, 31
        %s410 = smul.addr %s407, 32
        %s411 = sadd.s32 %s409, %s410
        %s412 = smul.addr %s411, 4
        %s413 = scalar_lea.vmem %s1, %s412
        %p414 = pneg %p87
        %p415 = pneg %p84
        %s416 = smul.u32 16, %s29
        %p417 = scmp.lt.s32.totalorder %s28, 1
        %s418 = scalar_select %p417, %s28, 1
        %p419 = scmp.lt.s32.totalorder %s416, 31
        %s420 = scalar_select %p419, %s416, 31
        %s421 = smul.addr %s418, 32
        %s422 = sadd.s32 %s420, %s421
        %s423 = smul.addr %s422, 4
        %s424 = scalar_lea.vmem %s2, %s423
        %p425 = pneg %p115
        %p426 = pneg %p112
        %s427 = smul.u32 16, %s29
        %p428 = scmp.lt.s32.totalorder %s28, 1
        %s429 = scalar_select %p428, %s28, 1
        %p430 = scmp.lt.s32.totalorder %s427, 31
        %s431 = scalar_select %p430, %s427, 31
        %s432 = smul.addr %s429, 32
        %s433 = sadd.s32 %s431, %s432
        %s434 = smul.addr %s433, 4
        %s435 = scalar_lea.vmem %s3, %s434
        %p436 = pneg %p143
        %p437 = pneg %p140
        %p438 = pneg %p164
        %p439 = pneg %p161
        %p440 = pneg %p185
        %p441 = pneg %p182
        %p442 = pneg %p206
        %p443 = pneg %p203
        %p444 = pneg %p227
        %p445 = pneg %p224
        %p446 = scmp.lt.s32.totalorder %s28, 1
        %s447 = scalar_select %p446, %s28, 1
        %s448 = smul.addr %s447, 2
        %s449 = scalar_lea.vmem %s8, %s448
        %p450 = pneg %p253
        %p451 = pneg %p250
        %p452 = pneg %p281
        %p453 = pneg %p278
        %s454 = sand.u32 %s268, 1
        %s455 = scalar_lea.sflag [#allocation4], %s454
        %s456 = sand.u32 %s268, 1
        %s457 = smul.addr %s456, 256
        %s458 = scalar_lea.vmem [#allocation5], %s457
        %s459 = smul.u32 16, %s29
        %p460 = scmp.lt.s32.totalorder %s28, 1
        %s461 = scalar_select %p460, %s28, 1
        %p462 = scmp.lt.s32.totalorder %s459, 31
        %s463 = scalar_select %p462, %s459, 31
        %s464 = smul.addr %s461, 32
        %s465 = sadd.s32 %s463, %s464
        %s466 = smul.addr %s465, 4
        %s467 = scalar_lea.vmem %s0, %s466
        %s468 = smul.u32 16, %s29
        %s469 = smul.u32 16, %s29
        %p470 = scmp.lt.s32.totalorder %s28, 1
        %s471 = scalar_select %p470, %s28, 1
        %p472 = scmp.lt.s32.totalorder %s469, 31
        %s473 = scalar_select %p472, %s469, 31
        %s474 = smul.addr %s471, 32
        %s475 = sadd.s32 %s473, %s474
        %s476 = smul.addr %s475, 4
        %s477 = scalar_lea.vmem %s1, %s476
        %s478 = smul.u32 16, %s29
        %s479 = smul.u32 16, %s29
        %p480 = scmp.lt.s32.totalorder %s28, 1
        %s481 = scalar_select %p480, %s28, 1
        %p482 = scmp.lt.s32.totalorder %s479, 31
        %s483 = scalar_select %p482, %s479, 31
        %s484 = smul.addr %s481, 32
        %s485 = sadd.s32 %s483, %s484
        %s486 = smul.addr %s485, 4
        %s487 = scalar_lea.vmem %s2, %s486
        %s488 = smul.u32 16, %s29
        %s489 = smul.u32 16, %s29
        %p490 = scmp.lt.s32.totalorder %s28, 1
        %s491 = scalar_select %p490, %s28, 1
        %p492 = scmp.lt.s32.totalorder %s489, 31
        %s493 = scalar_select %p492, %s489, 31
        %s494 = smul.addr %s491, 32
        %s495 = sadd.s32 %s493, %s494
        %s496 = smul.addr %s495, 4
        %s497 = scalar_lea.vmem %s3, %s496
        %s498 = smul.u32 16, %s29
        %p499 = scmp.lt.s32.totalorder %s28, 1
        %s500 = scalar_select %p499, %s28, 1
        %s501 = smul.addr %s500, 2
        %s502 = scalar_lea.vmem %s8, %s501
        %s503 = smul.u32 16, %s29
        %v505 = vld [vmem:[%s7] sm:$0xff]
        %v506 = vld [vmem:[%s467] sm:$0xf]
        %v507 = vld [vmem:[%s467 + $0x4] sm:$0xf]
        %v508 = vld [vmem:[%s467 + $0x8] sm:$0xf]
        %v509 = vld [vmem:[%s467 + $0xc] sm:$0xf]
        %v510 = vld [vmem:[%s467 + $0x10] sm:$0xf]
        %v511 = vld [vmem:[%s467 + $0x14] sm:$0xf]
        %v512 = vld [vmem:[%s467 + $0x18] sm:$0xf]
        %v513 = vld [vmem:[%s467 + $0x1c] sm:$0xf]
        %v514 = vld [vmem:[%s467 + $0x20] sm:$0xf]
        %v515 = vld [vmem:[%s467 + $0x24] sm:$0xf]
        %v516 = vld [vmem:[%s467 + $0x28] sm:$0xf]
        %v517 = vld [vmem:[%s467 + $0x2c] sm:$0xf]
        %v518 = vld [vmem:[%s467 + $0x30] sm:$0xf]
        %v519 = vld [vmem:[%s467 + $0x34] sm:$0xf]
        %v520 = vld [vmem:[%s467 + $0x38] sm:$0xf]
        %v521 = vld [vmem:[%s467 + $0x3c] sm:$0xf]
        %v522 = vld [vmem:[%s4] sm:$0xff]
        %v524 = vperm.slane %v505, 0
        %v525 = vperm.slane %v505, 4
        %v528 = vperm.slane %v524, 0
        %v529 = vperm.slane %v525, 0
        %v546 = vunpack.c.l.b16 %v506
        %v547 = vunpack.c.l.b16 %v507
        %v548 = vunpack.c.l.b16 %v508
        %v549 = vunpack.c.l.b16 %v509
        %v550 = vunpack.c.l.b16 %v510
        %v551 = vunpack.c.l.b16 %v511
        %v552 = vunpack.c.l.b16 %v512
        %v553 = vunpack.c.l.b16 %v513
        %v554 = vunpack.c.l.b16 %v514
        %v555 = vunpack.c.l.b16 %v515
        %v556 = vunpack.c.l.b16 %v516
        %v557 = vunpack.c.l.b16 %v517
        %v558 = vunpack.c.l.b16 %v518
        %v559 = vunpack.c.l.b16 %v519
        %v560 = vunpack.c.l.b16 %v520
        %v561 = vunpack.c.l.b16 %v521
        %v562 = vpack.c.b16 %v547, %v546
        %v563 = vpack.c.b16 %v549, %v548
        %v564 = vpack.c.b16 %v551, %v550
        %v565 = vpack.c.b16 %v553, %v552
        %v566 = vpack.c.b16 %v555, %v554
        %v567 = vpack.c.b16 %v557, %v556
        %v568 = vpack.c.b16 %v559, %v558
        %v569 = vpack.c.b16 %v561, %v560
        %v571 = vunpack.c.l.b16 %v522
        %v572 = vunpack.c.h.b16 %v522
        %v573 = vpack.c.b16 %v571, %v571
        %v574 = vpack.c.b16 %v572, %v572
        %vm575 = vcmask 64512
        %v577 = vsel %vm575, %v562, 0
        %v580 = vsel %vm575, %v563, 0
        %v583 = vsel %vm575, %v564, 0
        %v586 = vsel %vm575, %v565, 0
        %v589 = vsel %vm575, %v566, 0
        %v592 = vsel %vm575, %v567, 0
        %v595 = vsel %vm575, %v568, 0
        %v598 = vsel %vm575, %v569, 0
        %vm600 = vcmask 1043456
        %v602 = vsel %vm600, %v573, 0
        %v605 = vsel %vm600, %v574, 0
        %607 = vmatpush.bf16.msra.mxu0 0
        %608 = vmatpush.bf16.msra.mxu0 0
        %609 = vmatpush.bf16.msra.mxu0 0
        %610 = vmatpush.bf16.msra.mxu0 0
        %611 = vmatpush.bf16.msra.mxu0 0
        %612 = vmatpush.bf16.msra.mxu0 0
        %613 = vmatpush.bf16.msra.mxu0 0
        %614 = vmatpush.bf16.msra.mxu0 %v602
        %615 = vmatmul.bf16.gmra.mxu0 %v577
        %v616 = vpop.f32.mrf.mxu0
        %v617 = vadd.f32 %v528, %v616
        %v618 = vpop.f32.mrf.mxu0
        %v619 = vadd.f32 %v528, %v618
        %620 = vmatmul.bf16.gmra.mxu0 %v580
        %v621 = vpop.f32.mrf.mxu0
        %v622 = vadd.f32 %v528, %v621
        %v623 = vpop.f32.mrf.mxu0
        %v624 = vadd.f32 %v528, %v623
        %625 = vmatmul.bf16.gmra.mxu0 %v583
        %v626 = vpop.f32.mrf.mxu0
        %v627 = vadd.f32 %v528, %v626
        %v628 = vpop.f32.mrf.mxu0
        %v629 = vadd.f32 %v528, %v628
        %630 = vmatmul.bf16.gmra.mxu0 %v586
        %v631 = vpop.f32.mrf.mxu0
        %v632 = vadd.f32 %v528, %v631
        %v633 = vpop.f32.mrf.mxu0
        %v634 = vadd.f32 %v528, %v633
        %635 = vmatmul.bf16.gmra.mxu0 %v589
        %v636 = vpop.f32.mrf.mxu0
        %v637 = vadd.f32 %v528, %v636
        %v638 = vpop.f32.mrf.mxu0
        %v639 = vadd.f32 %v528, %v638
        %640 = vmatmul.bf16.gmra.mxu0 %v592
        %v641 = vpop.f32.mrf.mxu0
        %v642 = vadd.f32 %v528, %v641
        %v643 = vpop.f32.mrf.mxu0
        %v644 = vadd.f32 %v528, %v643
        %645 = vmatmul.bf16.gmra.mxu0 %v595
        %v646 = vpop.f32.mrf.mxu0
        %v647 = vadd.f32 %v528, %v646
        %v648 = vpop.f32.mrf.mxu0
        %v649 = vadd.f32 %v528, %v648
        %650 = vmatmul.bf16.gmra.mxu0 %v598
        %v651 = vpop.f32.mrf.mxu0
        %v652 = vadd.f32 %v528, %v651
        %v653 = vpop.f32.mrf.mxu0
        %v654 = vadd.f32 %v528, %v653
        %655 = vdwg.mxu0
        %656 = vmatpush.bf16.msra.mxu0 0
        %657 = vmatpush.bf16.msra.mxu0 0
        %658 = vmatpush.bf16.msra.mxu0 0
        %659 = vmatpush.bf16.msra.mxu0 0
        %660 = vmatpush.bf16.msra.mxu0 0
        %661 = vmatpush.bf16.msra.mxu0 0
        %662 = vmatpush.bf16.msra.mxu0 0
        %663 = vmatpush.bf16.msra.mxu0 %v605
        %664 = vmatmul.bf16.gmra.mxu0 %v577
        %v665 = vpop.f32.mrf.mxu0
        %v666 = vadd.f32 %v529, %v665
        %v667 = vpop.f32.mrf.mxu0
        %v668 = vadd.f32 %v529, %v667
        %669 = vmatmul.bf16.gmra.mxu0 %v580
        %v670 = vpop.f32.mrf.mxu0
        %v671 = vadd.f32 %v529, %v670
        %v672 = vpop.f32.mrf.mxu0
        %v673 = vadd.f32 %v529, %v672
        %674 = vmatmul.bf16.gmra.mxu0 %v583
        %v675 = vpop.f32.mrf.mxu0
        %v676 = vadd.f32 %v529, %v675
        %v677 = vpop.f32.mrf.mxu0
        %v678 = vadd.f32 %v529, %v677
        %679 = vmatmul.bf16.gmra.mxu0 %v586
        %v680 = vpop.f32.mrf.mxu0
        %v681 = vadd.f32 %v529, %v680
        %v682 = vpop.f32.mrf.mxu0
        %v683 = vadd.f32 %v529, %v682
        %684 = vmatmul.bf16.gmra.mxu0 %v589
        %v685 = vpop.f32.mrf.mxu0
        %v686 = vadd.f32 %v529, %v685
        %v687 = vpop.f32.mrf.mxu0
        %v688 = vadd.f32 %v529, %v687
        %689 = vmatmul.bf16.gmra.mxu0 %v592
        %v690 = vpop.f32.mrf.mxu0
        %v691 = vadd.f32 %v529, %v690
        %v692 = vpop.f32.mrf.mxu0
        %v693 = vadd.f32 %v529, %v692
        %694 = vmatmul.bf16.gmra.mxu0 %v595
        %v695 = vpop.f32.mrf.mxu0
        %v696 = vadd.f32 %v529, %v695
        %v697 = vpop.f32.mrf.mxu0
        %v698 = vadd.f32 %v529, %v697
        %699 = vmatmul.bf16.gmra.mxu0 %v598
        %v700 = vpop.f32.mrf.mxu0
        %v701 = vadd.f32 %v529, %v700
        %v702 = vpop.f32.mrf.mxu0
        %v703 = vadd.f32 %v529, %v702
        %704 = vdwg.mxu0
        %v705 = vpack.c.bf16 %v619, %v617
        %v706 = vpack.c.bf16 %v668, %v666
        %v707 = vpack.c.bf16 %v624, %v622
        %v708 = vpack.c.bf16 %v673, %v671
        %v709 = vpack.c.bf16 %v629, %v627
        %v710 = vpack.c.bf16 %v678, %v676
        %v711 = vpack.c.bf16 %v634, %v632
        %v712 = vpack.c.bf16 %v683, %v681
        %v713 = vpack.c.bf16 %v639, %v637
        %v714 = vpack.c.bf16 %v688, %v686
        %v715 = vpack.c.bf16 %v644, %v642
        %v716 = vpack.c.bf16 %v693, %v691
        %v717 = vpack.c.bf16 %v649, %v647
        %v718 = vpack.c.bf16 %v698, %v696
        %v719 = vpack.c.bf16 %v654, %v652
        %v720 = vpack.c.bf16 %v703, %v701
        %v721 = vld [vmem:[%s477] sm:$0xf]
        %v722 = vld [vmem:[%s477 + $0x4] sm:$0xf]
        %v723 = vld [vmem:[%s477 + $0x8] sm:$0xf]
        %v724 = vld [vmem:[%s477 + $0xc] sm:$0xf]
        %v725 = vld [vmem:[%s477 + $0x10] sm:$0xf]
        %v726 = vld [vmem:[%s477 + $0x14] sm:$0xf]
        %v727 = vld [vmem:[%s477 + $0x18] sm:$0xf]
        %v728 = vld [vmem:[%s477 + $0x1c] sm:$0xf]
        %v729 = vld [vmem:[%s477 + $0x20] sm:$0xf]
        %v730 = vld [vmem:[%s477 + $0x24] sm:$0xf]
        %v731 = vld [vmem:[%s477 + $0x28] sm:$0xf]
        %v732 = vld [vmem:[%s477 + $0x2c] sm:$0xf]
        %v733 = vld [vmem:[%s477 + $0x30] sm:$0xf]
        %v734 = vld [vmem:[%s477 + $0x34] sm:$0xf]
        %v735 = vld [vmem:[%s477 + $0x38] sm:$0xf]
        %v736 = vld [vmem:[%s477 + $0x3c] sm:$0xf]
        %v737 = vld [vmem:[%s5] sm:$0xff]
        %v738 = vld [vmem:[%s5 + $0x8] sm:$0xff]
        %v739 = vld [vmem:[%s5 + $0x10] sm:$0xff]
        %v740 = vld [vmem:[%s5 + $0x18] sm:$0xff]
        %v741 = vld [vmem:[%s5 + $0x20] sm:$0xff]
        %v742 = vld [vmem:[%s5 + $0x28] sm:$0xff]
        %v743 = vld [vmem:[%s5 + $0x30] sm:$0xff]
        %v744 = vld [vmem:[%s5 + $0x38] sm:$0xff]
        %v745 = vld [vmem:[%s5 + $0x40] sm:$0xff]
        %v746 = vperm.slane %v505, 1
        %v747 = vperm.slane %v505, 5
        %v750 = vperm.slane %v746, 1
        %v751 = vperm.slane %v747, 1
        %v768 = vunpack.c.l.b16 %v721
        %v769 = vunpack.c.l.b16 %v722
        %v770 = vunpack.c.l.b16 %v723
        %v771 = vunpack.c.l.b16 %v724
        %v772 = vunpack.c.l.b16 %v725
        %v773 = vunpack.c.l.b16 %v726
        %v774 = vunpack.c.l.b16 %v727
        %v775 = vunpack.c.l.b16 %v728
        %v776 = vunpack.c.l.b16 %v729
        %v777 = vunpack.c.l.b16 %v730
        %v778 = vunpack.c.l.b16 %v731
        %v779 = vunpack.c.l.b16 %v732
        %v780 = vunpack.c.l.b16 %v733
        %v781 = vunpack.c.l.b16 %v734
        %v782 = vunpack.c.l.b16 %v735
        %v783 = vunpack.c.l.b16 %v736
        %v784 = vpack.c.b16 %v769, %v768
        %v785 = vpack.c.b16 %v771, %v770
        %v786 = vpack.c.b16 %v773, %v772
        %v787 = vpack.c.b16 %v775, %v774
        %v788 = vpack.c.b16 %v777, %v776
        %v789 = vpack.c.b16 %v779, %v778
        %v790 = vpack.c.b16 %v781, %v780
        %v791 = vpack.c.b16 %v783, %v782
        %v801 = vunpack.c.l.b16 %v737
        %v802 = vunpack.c.h.b16 %v737
        %v803 = vunpack.c.l.b16 %v738
        %v804 = vunpack.c.h.b16 %v738
        %v805 = vunpack.c.l.b16 %v739
        %v806 = vunpack.c.h.b16 %v739
        %v807 = vunpack.c.l.b16 %v740
        %v808 = vunpack.c.h.b16 %v740
        %v809 = vunpack.c.l.b16 %v741
        %v810 = vunpack.c.h.b16 %v741
        %v811 = vunpack.c.l.b16 %v742
        %v812 = vunpack.c.h.b16 %v742
        %v813 = vunpack.c.l.b16 %v743
        %v814 = vunpack.c.h.b16 %v743
        %v815 = vunpack.c.l.b16 %v744
        %v816 = vunpack.c.h.b16 %v744
        %v817 = vunpack.c.l.b16 %v745
        %v818 = vunpack.c.h.b16 %v745
        %v819 = vpack.c.b16 %v803, %v801
        %v820 = vpack.c.b16 %v804, %v802
        %v821 = vpack.c.b16 %v807, %v805
        %v822 = vpack.c.b16 %v808, %v806
        %v823 = vpack.c.b16 %v811, %v809
        %v824 = vpack.c.b16 %v812, %v810
        %v825 = vpack.c.b16 %v815, %v813
        %v826 = vpack.c.b16 %v816, %v814
        %v827 = vpack.c.b16 %v817, %v817
        %v828 = vpack.c.b16 %v818, %v818
        %vm837 = vcmask 588800
        %v839 = vsel %vm837, %v784, 0
        %v842 = vsel %vm837, %v785, 0
        %v845 = vsel %vm837, %v786, 0
        %v848 = vsel %vm837, %v787, 0
        %v851 = vsel %vm837, %v788, 0
        %v854 = vsel %vm837, %v789, 0
        %v857 = vsel %vm837, %v790, 0
        %v860 = vsel %vm837, %v791, 0
        %v863 = vsel %vm600, %v827, 0
        %v866 = vsel %vm600, %v828, 0
        %868 = vmatpush.bf16.msra.mxu0 0
        %869 = vmatpush.bf16.msra.mxu0 0
        %870 = vmatpush.bf16.msra.mxu0 0
        %871 = vmatpush.bf16.msra.mxu0 %v863
        %872 = vmatpush.bf16.msra.mxu0 %v825
        %873 = vmatpush.bf16.msra.mxu0 %v823
        %874 = vmatpush.bf16.msra.mxu0 %v821
        %875 = vmatpush.bf16.msra.mxu0 %v819
        %876 = vmatmul.bf16.gmra.mxu0 %v839
        %v877 = vpop.f32.mrf.mxu0
        %v878 = vadd.f32 %v750, %v877
        %v879 = vpop.f32.mrf.mxu0
        %v880 = vadd.f32 %v750, %v879
        %881 = vmatmul.bf16.gmra.mxu0 %v842
        %v882 = vpop.f32.mrf.mxu0
        %v883 = vadd.f32 %v750, %v882
        %v884 = vpop.f32.mrf.mxu0
        %v885 = vadd.f32 %v750, %v884
        %886 = vmatmul.bf16.gmra.mxu0 %v845
        %v887 = vpop.f32.mrf.mxu0
        %v888 = vadd.f32 %v750, %v887
        %v889 = vpop.f32.mrf.mxu0
        %v890 = vadd.f32 %v750, %v889
        %891 = vmatmul.bf16.gmra.mxu0 %v848
        %v892 = vpop.f32.mrf.mxu0
        %v893 = vadd.f32 %v750, %v892
        %v894 = vpop.f32.mrf.mxu0
        %v895 = vadd.f32 %v750, %v894
        %896 = vmatmul.bf16.gmra.mxu0 %v851
        %v897 = vpop.f32.mrf.mxu0
        %v898 = vadd.f32 %v750, %v897
        %v899 = vpop.f32.mrf.mxu0
        %v900 = vadd.f32 %v750, %v899
        %901 = vmatmul.bf16.gmra.mxu0 %v854
        %v902 = vpop.f32.mrf.mxu0
        %v903 = vadd.f32 %v750, %v902
        %v904 = vpop.f32.mrf.mxu0
        %v905 = vadd.f32 %v750, %v904
        %906 = vmatmul.bf16.gmra.mxu0 %v857
        %v907 = vpop.f32.mrf.mxu0
        %v908 = vadd.f32 %v750, %v907
        %v909 = vpop.f32.mrf.mxu0
        %v910 = vadd.f32 %v750, %v909
        %911 = vmatmul.bf16.gmra.mxu0 %v860
        %v912 = vpop.f32.mrf.mxu0
        %v913 = vadd.f32 %v750, %v912
        %v914 = vpop.f32.mrf.mxu0
        %v915 = vadd.f32 %v750, %v914
        %916 = vdwg.mxu0
        %917 = vmatpush.bf16.msra.mxu0 0
        %918 = vmatpush.bf16.msra.mxu0 0
        %919 = vmatpush.bf16.msra.mxu0 0
        %920 = vmatpush.bf16.msra.mxu0 %v866
        %921 = vmatpush.bf16.msra.mxu0 %v826
        %922 = vmatpush.bf16.msra.mxu0 %v824
        %923 = vmatpush.bf16.msra.mxu0 %v822
        %924 = vmatpush.bf16.msra.mxu0 %v820
        %925 = vmatmul.bf16.gmra.mxu0 %v839
        %v926 = vpop.f32.mrf.mxu0
        %v927 = vadd.f32 %v751, %v926
        %v928 = vpop.f32.mrf.mxu0
        %v929 = vadd.f32 %v751, %v928
        %930 = vmatmul.bf16.gmra.mxu0 %v842
        %v931 = vpop.f32.mrf.mxu0
        %v932 = vadd.f32 %v751, %v931
        %v933 = vpop.f32.mrf.mxu0
        %v934 = vadd.f32 %v751, %v933
        %935 = vmatmul.bf16.gmra.mxu0 %v845
        %v936 = vpop.f32.mrf.mxu0
        %v937 = vadd.f32 %v751, %v936
        %v938 = vpop.f32.mrf.mxu0
        %v939 = vadd.f32 %v751, %v938
        %940 = vmatmul.bf16.gmra.mxu0 %v848
        %v941 = vpop.f32.mrf.mxu0
        %v942 = vadd.f32 %v751, %v941
        %v943 = vpop.f32.mrf.mxu0
        %v944 = vadd.f32 %v751, %v943
        %945 = vmatmul.bf16.gmra.mxu0 %v851
        %v946 = vpop.f32.mrf.mxu0
        %v947 = vadd.f32 %v751, %v946
        %v948 = vpop.f32.mrf.mxu0
        %v949 = vadd.f32 %v751, %v948
        %950 = vmatmul.bf16.gmra.mxu0 %v854
        %v951 = vpop.f32.mrf.mxu0
        %v952 = vadd.f32 %v751, %v951
        %v953 = vpop.f32.mrf.mxu0
        %v954 = vadd.f32 %v751, %v953
        %955 = vmatmul.bf16.gmra.mxu0 %v857
        %v956 = vpop.f32.mrf.mxu0
        %v957 = vadd.f32 %v751, %v956
        %v958 = vpop.f32.mrf.mxu0
        %v959 = vadd.f32 %v751, %v958
        %960 = vmatmul.bf16.gmra.mxu0 %v860
        %v961 = vpop.f32.mrf.mxu0
        %v962 = vadd.f32 %v751, %v961
        %v963 = vpop.f32.mrf.mxu0
        %v964 = vadd.f32 %v751, %v963
        %965 = vdwg.mxu0
        %v966 = vpack.c.bf16 %v880, %v878
        %v967 = vpack.c.bf16 %v929, %v927
        %v968 = vpack.c.bf16 %v885, %v883
        %v969 = vpack.c.bf16 %v934, %v932
        %v970 = vpack.c.bf16 %v890, %v888
        %v971 = vpack.c.bf16 %v939, %v937
        %v972 = vpack.c.bf16 %v895, %v893
        %v973 = vpack.c.bf16 %v944, %v942
        %v974 = vpack.c.bf16 %v900, %v898
        %v975 = vpack.c.bf16 %v949, %v947
        %v976 = vpack.c.bf16 %v905, %v903
        %v977 = vpack.c.bf16 %v954, %v952
        %v978 = vpack.c.bf16 %v910, %v908
        %v979 = vpack.c.bf16 %v959, %v957
        %v980 = vpack.c.bf16 %v915, %v913
        %v981 = vpack.c.bf16 %v964, %v962
        %v982 = vld [vmem:[%s487] sm:$0xf]
        %v983 = vld [vmem:[%s487 + $0x4] sm:$0xf]
        %v984 = vld [vmem:[%s487 + $0x8] sm:$0xf]
        %v985 = vld [vmem:[%s487 + $0xc] sm:$0xf]
        %v986 = vld [vmem:[%s487 + $0x10] sm:$0xf]
        %v987 = vld [vmem:[%s487 + $0x14] sm:$0xf]
        %v988 = vld [vmem:[%s487 + $0x18] sm:$0xf]
        %v989 = vld [vmem:[%s487 + $0x1c] sm:$0xf]
        %v990 = vld [vmem:[%s487 + $0x20] sm:$0xf]
        %v991 = vld [vmem:[%s487 + $0x24] sm:$0xf]
        %v992 = vld [vmem:[%s487 + $0x28] sm:$0xf]
        %v993 = vld [vmem:[%s487 + $0x2c] sm:$0xf]
        %v994 = vld [vmem:[%s487 + $0x30] sm:$0xf]
        %v995 = vld [vmem:[%s487 + $0x34] sm:$0xf]
        %v996 = vld [vmem:[%s487 + $0x38] sm:$0xf]
        %v997 = vld [vmem:[%s487 + $0x3c] sm:$0xf]
        %s998 = scalar_lea.vmem %s5, 72
        %v999 = vld [vmem:[%s998] sm:$0xff]
        %v1000 = vld [vmem:[%s998 + $0x8] sm:$0xff]
        %v1001 = vld [vmem:[%s998 + $0x10] sm:$0xff]
        %v1002 = vld [vmem:[%s998 + $0x18] sm:$0xff]
        %v1003 = vld [vmem:[%s998 + $0x20] sm:$0xff]
        %v1004 = vld [vmem:[%s998 + $0x28] sm:$0xff]
        %v1005 = vld [vmem:[%s998 + $0x30] sm:$0xff]
        %v1006 = vld [vmem:[%s998 + $0x38] sm:$0xff]
        %v1007 = vld [vmem:[%s998 + $0x40] sm:$0xff]
        %v1008 = vperm.slane %v505, 2
        %v1009 = vperm.slane %v505, 6
        %v1012 = vperm.slane %v1008, 2
        %v1013 = vperm.slane %v1009, 2
        %v1030 = vunpack.c.l.b16 %v982
        %v1031 = vunpack.c.l.b16 %v983
        %v1032 = vunpack.c.l.b16 %v984
        %v1033 = vunpack.c.l.b16 %v985
        %v1034 = vunpack.c.l.b16 %v986
        %v1035 = vunpack.c.l.b16 %v987
        %v1036 = vunpack.c.l.b16 %v988
        %v1037 = vunpack.c.l.b16 %v989
        %v1038 = vunpack.c.l.b16 %v990
        %v1039 = vunpack.c.l.b16 %v991
        %v1040 = vunpack.c.l.b16 %v992
        %v1041 = vunpack.c.l.b16 %v993
        %v1042 = vunpack.c.l.b16 %v994
        %v1043 = vunpack.c.l.b16 %v995
        %v1044 = vunpack.c.l.b16 %v996
        %v1045 = vunpack.c.l.b16 %v997
        %v1046 = vpack.c.b16 %v1031, %v1030
        %v1047 = vpack.c.b16 %v1033, %v1032
        %v1048 = vpack.c.b16 %v1035, %v1034
        %v1049 = vpack.c.b16 %v1037, %v1036
        %v1050 = vpack.c.b16 %v1039, %v1038
        %v1051 = vpack.c.b16 %v1041, %v1040
        %v1052 = vpack.c.b16 %v1043, %v1042
        %v1053 = vpack.c.b16 %v1045, %v1044
        %v1063 = vunpack.c.l.b16 %v999
        %v1064 = vunpack.c.h.b16 %v999
        %v1065 = vunpack.c.l.b16 %v1000
        %v1066 = vunpack.c.h.b16 %v1000
        %v1067 = vunpack.c.l.b16 %v1001
        %v1068 = vunpack.c.h.b16 %v1001
        %v1069 = vunpack.c.l.b16 %v1002
        %v1070 = vunpack.c.h.b16 %v1002
        %v1071 = vunpack.c.l.b16 %v1003
        %v1072 = vunpack.c.h.b16 %v1003
        %v1073 = vunpack.c.l.b16 %v1004
        %v1074 = vunpack.c.h.b16 %v1004
        %v1075 = vunpack.c.l.b16 %v1005
        %v1076 = vunpack.c.h.b16 %v1005
        %v1077 = vunpack.c.l.b16 %v1006
        %v1078 = vunpack.c.h.b16 %v1006
        %v1079 = vunpack.c.l.b16 %v1007
        %v1080 = vunpack.c.h.b16 %v1007
        %v1081 = vpack.c.b16 %v1065, %v1063
        %v1082 = vpack.c.b16 %v1066, %v1064
        %v1083 = vpack.c.b16 %v1069, %v1067
        %v1084 = vpack.c.b16 %v1070, %v1068
        %v1085 = vpack.c.b16 %v1073, %v1071
        %v1086 = vpack.c.b16 %v1074, %v1072
        %v1087 = vpack.c.b16 %v1077, %v1075
        %v1088 = vpack.c.b16 %v1078, %v1076
        %v1089 = vpack.c.b16 %v1079, %v1079
        %v1090 = vpack.c.b16 %v1080, %v1080
        %v1100 = vsel %vm837, %v1046, 0
        %v1103 = vsel %vm837, %v1047, 0
        %v1106 = vsel %vm837, %v1048, 0
        %v1109 = vsel %vm837, %v1049, 0
        %v1112 = vsel %vm837, %v1050, 0
        %v1115 = vsel %vm837, %v1051, 0
        %v1118 = vsel %vm837, %v1052, 0
        %v1121 = vsel %vm837, %v1053, 0
        %v1124 = vsel %vm600, %v1089, 0
        %v1127 = vsel %vm600, %v1090, 0
        %1129 = vmatpush.bf16.msra.mxu0 0
        %1130 = vmatpush.bf16.msra.mxu0 0
        %1131 = vmatpush.bf16.msra.mxu0 0
        %1132 = vmatpush.bf16.msra.mxu0 %v1124
        %1133 = vmatpush.bf16.msra.mxu0 %v1087
        %1134 = vmatpush.bf16.msra.mxu0 %v1085
        %1135 = vmatpush.bf16.msra.mxu0 %v1083
        %1136 = vmatpush.bf16.msra.mxu0 %v1081
        %1137 = vmatmul.bf16.gmra.mxu0 %v1100
        %v1138 = vpop.f32.mrf.mxu0
        %v1139 = vadd.f32 %v1012, %v1138
        %v1140 = vpop.f32.mrf.mxu0
        %v1141 = vadd.f32 %v1012, %v1140
        %1142 = vmatmul.bf16.gmra.mxu0 %v1103
        %v1143 = vpop.f32.mrf.mxu0
        %v1144 = vadd.f32 %v1012, %v1143
        %v1145 = vpop.f32.mrf.mxu0
        %v1146 = vadd.f32 %v1012, %v1145
        %1147 = vmatmul.bf16.gmra.mxu0 %v1106
        %v1148 = vpop.f32.mrf.mxu0
        %v1149 = vadd.f32 %v1012, %v1148
        %v1150 = vpop.f32.mrf.mxu0
        %v1151 = vadd.f32 %v1012, %v1150
        %1152 = vmatmul.bf16.gmra.mxu0 %v1109
        %v1153 = vpop.f32.mrf.mxu0
        %v1154 = vadd.f32 %v1012, %v1153
        %v1155 = vpop.f32.mrf.mxu0
        %v1156 = vadd.f32 %v1012, %v1155
        %1157 = vmatmul.bf16.gmra.mxu0 %v1112
        %v1158 = vpop.f32.mrf.mxu0
        %v1159 = vadd.f32 %v1012, %v1158
        %v1160 = vpop.f32.mrf.mxu0
        %v1161 = vadd.f32 %v1012, %v1160
        %1162 = vmatmul.bf16.gmra.mxu0 %v1115
        %v1163 = vpop.f32.mrf.mxu0
        %v1164 = vadd.f32 %v1012, %v1163
        %v1165 = vpop.f32.mrf.mxu0
        %v1166 = vadd.f32 %v1012, %v1165
        %1167 = vmatmul.bf16.gmra.mxu0 %v1118
        %v1168 = vpop.f32.mrf.mxu0
        %v1169 = vadd.f32 %v1012, %v1168
        %v1170 = vpop.f32.mrf.mxu0
        %v1171 = vadd.f32 %v1012, %v1170
        %1172 = vmatmul.bf16.gmra.mxu0 %v1121
        %v1173 = vpop.f32.mrf.mxu0
        %v1174 = vadd.f32 %v1012, %v1173
        %v1175 = vpop.f32.mrf.mxu0
        %v1176 = vadd.f32 %v1012, %v1175
        %1177 = vdwg.mxu0
        %1178 = vmatpush.bf16.msra.mxu0 0
        %1179 = vmatpush.bf16.msra.mxu0 0
        %1180 = vmatpush.bf16.msra.mxu0 0
        %1181 = vmatpush.bf16.msra.mxu0 %v1127
        %1182 = vmatpush.bf16.msra.mxu0 %v1088
        %1183 = vmatpush.bf16.msra.mxu0 %v1086
        %1184 = vmatpush.bf16.msra.mxu0 %v1084
        %1185 = vmatpush.bf16.msra.mxu0 %v1082
        %1186 = vmatmul.bf16.gmra.mxu0 %v1100
        %v1187 = vpop.f32.mrf.mxu0
        %v1188 = vadd.f32 %v1013, %v1187
        %v1189 = vpop.f32.mrf.mxu0
        %v1190 = vadd.f32 %v1013, %v1189
        %1191 = vmatmul.bf16.gmra.mxu0 %v1103
        %v1192 = vpop.f32.mrf.mxu0
        %v1193 = vadd.f32 %v1013, %v1192
        %v1194 = vpop.f32.mrf.mxu0
        %v1195 = vadd.f32 %v1013, %v1194
        %1196 = vmatmul.bf16.gmra.mxu0 %v1106
        %v1197 = vpop.f32.mrf.mxu0
        %v1198 = vadd.f32 %v1013, %v1197
        %v1199 = vpop.f32.mrf.mxu0
        %v1200 = vadd.f32 %v1013, %v1199
        %1201 = vmatmul.bf16.gmra.mxu0 %v1109
        %v1202 = vpop.f32.mrf.mxu0
        %v1203 = vadd.f32 %v1013, %v1202
        %v1204 = vpop.f32.mrf.mxu0
        %v1205 = vadd.f32 %v1013, %v1204
        %1206 = vmatmul.bf16.gmra.mxu0 %v1112
        %v1207 = vpop.f32.mrf.mxu0
        %v1208 = vadd.f32 %v1013, %v1207
        %v1209 = vpop.f32.mrf.mxu0
        %v1210 = vadd.f32 %v1013, %v1209
        %1211 = vmatmul.bf16.gmra.mxu0 %v1115
        %v1212 = vpop.f32.mrf.mxu0
        %v1213 = vadd.f32 %v1013, %v1212
        %v1214 = vpop.f32.mrf.mxu0
        %v1215 = vadd.f32 %v1013, %v1214
        %1216 = vmatmul.bf16.gmra.mxu0 %v1118
        %v1217 = vpop.f32.mrf.mxu0
        %v1218 = vadd.f32 %v1013, %v1217
        %v1219 = vpop.f32.mrf.mxu0
        %v1220 = vadd.f32 %v1013, %v1219
        %1221 = vmatmul.bf16.gmra.mxu0 %v1121
        %v1222 = vpop.f32.mrf.mxu0
        %v1223 = vadd.f32 %v1013, %v1222
        %v1224 = vpop.f32.mrf.mxu0
        %v1225 = vadd.f32 %v1013, %v1224
        %1226 = vdwg.mxu0
        %v1227 = vpack.c.bf16 %v1141, %v1139
        %v1228 = vpack.c.bf16 %v1190, %v1188
        %v1229 = vpack.c.bf16 %v1146, %v1144
        %v1230 = vpack.c.bf16 %v1195, %v1193
        %v1231 = vpack.c.bf16 %v1151, %v1149
        %v1232 = vpack.c.bf16 %v1200, %v1198
        %v1233 = vpack.c.bf16 %v1156, %v1154
        %v1234 = vpack.c.bf16 %v1205, %v1203
        %v1235 = vpack.c.bf16 %v1161, %v1159
        %v1236 = vpack.c.bf16 %v1210, %v1208
        %v1237 = vpack.c.bf16 %v1166, %v1164
        %v1238 = vpack.c.bf16 %v1215, %v1213
        %v1239 = vpack.c.bf16 %v1171, %v1169
        %v1240 = vpack.c.bf16 %v1220, %v1218
        %v1241 = vpack.c.bf16 %v1176, %v1174
        %v1242 = vpack.c.bf16 %v1225, %v1223
        %v1243 = vld [vmem:[%s497] sm:$0xf]
        %v1244 = vld [vmem:[%s497 + $0x4] sm:$0xf]
        %v1245 = vld [vmem:[%s497 + $0x8] sm:$0xf]
        %v1246 = vld [vmem:[%s497 + $0xc] sm:$0xf]
        %v1247 = vld [vmem:[%s497 + $0x10] sm:$0xf]
        %v1248 = vld [vmem:[%s497 + $0x14] sm:$0xf]
        %v1249 = vld [vmem:[%s497 + $0x18] sm:$0xf]
        %v1250 = vld [vmem:[%s497 + $0x1c] sm:$0xf]
        %v1251 = vld [vmem:[%s497 + $0x20] sm:$0xf]
        %v1252 = vld [vmem:[%s497 + $0x24] sm:$0xf]
        %v1253 = vld [vmem:[%s497 + $0x28] sm:$0xf]
        %v1254 = vld [vmem:[%s497 + $0x2c] sm:$0xf]
        %v1255 = vld [vmem:[%s497 + $0x30] sm:$0xf]
        %v1256 = vld [vmem:[%s497 + $0x34] sm:$0xf]
        %v1257 = vld [vmem:[%s497 + $0x38] sm:$0xf]
        %v1258 = vld [vmem:[%s497 + $0x3c] sm:$0xf]
        %s1259 = scalar_lea.vmem %s5, 144
        %v1260 = vld [vmem:[%s1259] sm:$0xff]
        %v1261 = vld [vmem:[%s1259 + $0x8] sm:$0xff]
        %v1262 = vld [vmem:[%s1259 + $0x10] sm:$0xff]
        %v1263 = vld [vmem:[%s1259 + $0x18] sm:$0xff]
        %v1264 = vld [vmem:[%s1259 + $0x20] sm:$0xff]
        %v1265 = vld [vmem:[%s1259 + $0x28] sm:$0xff]
        %v1266 = vld [vmem:[%s1259 + $0x30] sm:$0xff]
        %v1267 = vld [vmem:[%s1259 + $0x38] sm:$0xff]
        %v1268 = vld [vmem:[%s1259 + $0x40] sm:$0xff]
        %v1269 = vperm.slane %v505, 3
        %v1270 = vperm.slane %v505, 7
        %v1273 = vperm.slane %v1269, 3
        %v1274 = vperm.slane %v1270, 3
        %v1291 = vunpack.c.l.b16 %v1243
        %v1292 = vunpack.c.l.b16 %v1244
        %v1293 = vunpack.c.l.b16 %v1245
        %v1294 = vunpack.c.l.b16 %v1246
        %v1295 = vunpack.c.l.b16 %v1247
        %v1296 = vunpack.c.l.b16 %v1248
        %v1297 = vunpack.c.l.b16 %v1249
        %v1298 = vunpack.c.l.b16 %v1250
        %v1299 = vunpack.c.l.b16 %v1251
        %v1300 = vunpack.c.l.b16 %v1252
        %v1301 = vunpack.c.l.b16 %v1253
        %v1302 = vunpack.c.l.b16 %v1254
        %v1303 = vunpack.c.l.b16 %v1255
        %v1304 = vunpack.c.l.b16 %v1256
        %v1305 = vunpack.c.l.b16 %v1257
        %v1306 = vunpack.c.l.b16 %v1258
        %v1307 = vpack.c.b16 %v1292, %v1291
        %v1308 = vpack.c.b16 %v1294, %v1293
        %v1309 = vpack.c.b16 %v1296, %v1295
        %v1310 = vpack.c.b16 %v1298, %v1297
        %v1311 = vpack.c.b16 %v1300, %v1299
        %v1312 = vpack.c.b16 %v1302, %v1301
        %v1313 = vpack.c.b16 %v1304, %v1303
        %v1314 = vpack.c.b16 %v1306, %v1305
        %v1324 = vunpack.c.l.b16 %v1260
        %v1325 = vunpack.c.h.b16 %v1260
        %v1326 = vunpack.c.l.b16 %v1261
        %v1327 = vunpack.c.h.b16 %v1261
        %v1328 = vunpack.c.l.b16 %v1262
        %v1329 = vunpack.c.h.b16 %v1262
        %v1330 = vunpack.c.l.b16 %v1263
        %v1331 = vunpack.c.h.b16 %v1263
        %v1332 = vunpack.c.l.b16 %v1264
        %v1333 = vunpack.c.h.b16 %v1264
        %v1334 = vunpack.c.l.b16 %v1265
        %v1335 = vunpack.c.h.b16 %v1265
        %v1336 = vunpack.c.l.b16 %v1266
        %v1337 = vunpack.c.h.b16 %v1266
        %v1338 = vunpack.c.l.b16 %v1267
        %v1339 = vunpack.c.h.b16 %v1267
        %v1340 = vunpack.c.l.b16 %v1268
        %v1341 = vunpack.c.h.b16 %v1268
        %v1342 = vpack.c.b16 %v1326, %v1324
        %v1343 = vpack.c.b16 %v1327, %v1325
        %v1344 = vpack.c.b16 %v1330, %v1328
        %v1345 = vpack.c.b16 %v1331, %v1329
        %v1346 = vpack.c.b16 %v1334, %v1332
        %v1347 = vpack.c.b16 %v1335, %v1333
        %v1348 = vpack.c.b16 %v1338, %v1336
        %v1349 = vpack.c.b16 %v1339, %v1337
        %v1350 = vpack.c.b16 %v1340, %v1340
        %v1351 = vpack.c.b16 %v1341, %v1341
        %v1361 = vsel %vm837, %v1307, 0
        %v1364 = vsel %vm837, %v1308, 0
        %v1367 = vsel %vm837, %v1309, 0
        %v1370 = vsel %vm837, %v1310, 0
        %v1373 = vsel %vm837, %v1311, 0
        %v1376 = vsel %vm837, %v1312, 0
        %v1379 = vsel %vm837, %v1313, 0
        %v1382 = vsel %vm837, %v1314, 0
        %v1385 = vsel %vm600, %v1350, 0
        %v1388 = vsel %vm600, %v1351, 0
        %1390 = vmatpush.bf16.msra.mxu0 0
        %1391 = vmatpush.bf16.msra.mxu0 0
        %1392 = vmatpush.bf16.msra.mxu0 0
        %1393 = vmatpush.bf16.msra.mxu0 %v1385
        %1394 = vmatpush.bf16.msra.mxu0 %v1348
        %1395 = vmatpush.bf16.msra.mxu0 %v1346
        %1396 = vmatpush.bf16.msra.mxu0 %v1344
        %1397 = vmatpush.bf16.msra.mxu0 %v1342
        %1398 = vmatmul.bf16.gmra.mxu0 %v1361
        %v1399 = vpop.f32.mrf.mxu0
        %v1400 = vadd.f32 %v1273, %v1399
        %v1401 = vpop.f32.mrf.mxu0
        %v1402 = vadd.f32 %v1273, %v1401
        %1403 = vmatmul.bf16.gmra.mxu0 %v1364
        %v1404 = vpop.f32.mrf.mxu0
        %v1405 = vadd.f32 %v1273, %v1404
        %v1406 = vpop.f32.mrf.mxu0
        %v1407 = vadd.f32 %v1273, %v1406
        %1408 = vmatmul.bf16.gmra.mxu0 %v1367
        %v1409 = vpop.f32.mrf.mxu0
        %v1410 = vadd.f32 %v1273, %v1409
        %v1411 = vpop.f32.mrf.mxu0
        %v1412 = vadd.f32 %v1273, %v1411
        %1413 = vmatmul.bf16.gmra.mxu0 %v1370
        %v1414 = vpop.f32.mrf.mxu0
        %v1415 = vadd.f32 %v1273, %v1414
        %v1416 = vpop.f32.mrf.mxu0
        %v1417 = vadd.f32 %v1273, %v1416
        %1418 = vmatmul.bf16.gmra.mxu0 %v1373
        %v1419 = vpop.f32.mrf.mxu0
        %v1420 = vadd.f32 %v1273, %v1419
        %v1421 = vpop.f32.mrf.mxu0
        %v1422 = vadd.f32 %v1273, %v1421
        %1423 = vmatmul.bf16.gmra.mxu0 %v1376
        %v1424 = vpop.f32.mrf.mxu0
        %v1425 = vadd.f32 %v1273, %v1424
        %v1426 = vpop.f32.mrf.mxu0
        %v1427 = vadd.f32 %v1273, %v1426
        %1428 = vmatmul.bf16.gmra.mxu0 %v1379
        %v1429 = vpop.f32.mrf.mxu0
        %v1430 = vadd.f32 %v1273, %v1429
        %v1431 = vpop.f32.mrf.mxu0
        %v1432 = vadd.f32 %v1273, %v1431
        %1433 = vmatmul.bf16.gmra.mxu0 %v1382
        %v1434 = vpop.f32.mrf.mxu0
        %v1435 = vadd.f32 %v1273, %v1434
        %v1436 = vpop.f32.mrf.mxu0
        %v1437 = vadd.f32 %v1273, %v1436
        %1438 = vdwg.mxu0
        %1439 = vmatpush.bf16.msra.mxu0 0
        %1440 = vmatpush.bf16.msra.mxu0 0
        %1441 = vmatpush.bf16.msra.mxu0 0
        %1442 = vmatpush.bf16.msra.mxu0 %v1388
        %1443 = vmatpush.bf16.msra.mxu0 %v1349
        %1444 = vmatpush.bf16.msra.mxu0 %v1347
        %1445 = vmatpush.bf16.msra.mxu0 %v1345
        %1446 = vmatpush.bf16.msra.mxu0 %v1343
        %1447 = vmatmul.bf16.gmra.mxu0 %v1361
        %v1448 = vpop.f32.mrf.mxu0
        %v1449 = vadd.f32 %v1274, %v1448
        %v1450 = vpop.f32.mrf.mxu0
        %v1451 = vadd.f32 %v1274, %v1450
        %1452 = vmatmul.bf16.gmra.mxu0 %v1364
        %v1453 = vpop.f32.mrf.mxu0
        %v1454 = vadd.f32 %v1274, %v1453
        %v1455 = vpop.f32.mrf.mxu0
        %v1456 = vadd.f32 %v1274, %v1455
        %1457 = vmatmul.bf16.gmra.mxu0 %v1367
        %v1458 = vpop.f32.mrf.mxu0
        %v1459 = vadd.f32 %v1274, %v1458
        %v1460 = vpop.f32.mrf.mxu0
        %v1461 = vadd.f32 %v1274, %v1460
        %1462 = vmatmul.bf16.gmra.mxu0 %v1370
        %v1463 = vpop.f32.mrf.mxu0
        %v1464 = vadd.f32 %v1274, %v1463
        %v1465 = vpop.f32.mrf.mxu0
        %v1466 = vadd.f32 %v1274, %v1465
        %1467 = vmatmul.bf16.gmra.mxu0 %v1373
        %v1468 = vpop.f32.mrf.mxu0
        %v1469 = vadd.f32 %v1274, %v1468
        %v1470 = vpop.f32.mrf.mxu0
        %v1471 = vadd.f32 %v1274, %v1470
        %1472 = vmatmul.bf16.gmra.mxu0 %v1376
        %v1473 = vpop.f32.mrf.mxu0
        %v1474 = vadd.f32 %v1274, %v1473
        %v1475 = vpop.f32.mrf.mxu0
        %v1476 = vadd.f32 %v1274, %v1475
        %1477 = vmatmul.bf16.gmra.mxu0 %v1379
        %v1478 = vpop.f32.mrf.mxu0
        %v1479 = vadd.f32 %v1274, %v1478
        %v1480 = vpop.f32.mrf.mxu0
        %v1481 = vadd.f32 %v1274, %v1480
        %1482 = vmatmul.bf16.gmra.mxu0 %v1382
        %v1483 = vpop.f32.mrf.mxu0
        %v1484 = vadd.f32 %v1274, %v1483
        %v1485 = vpop.f32.mrf.mxu0
        %v1486 = vadd.f32 %v1274, %v1485
        %1487 = vdwg.mxu0
        %v1488 = vpack.c.bf16 %v1402, %v1400
        %v1489 = vpack.c.bf16 %v1451, %v1449
        %v1490 = vpack.c.bf16 %v1407, %v1405
        %v1491 = vpack.c.bf16 %v1456, %v1454
        %v1492 = vpack.c.bf16 %v1412, %v1410
        %v1493 = vpack.c.bf16 %v1461, %v1459
        %v1494 = vpack.c.bf16 %v1417, %v1415
        %v1495 = vpack.c.bf16 %v1466, %v1464
        %v1496 = vpack.c.bf16 %v1422, %v1420
        %v1497 = vpack.c.bf16 %v1471, %v1469
        %v1498 = vpack.c.bf16 %v1427, %v1425
        %v1499 = vpack.c.bf16 %v1476, %v1474
        %v1500 = vpack.c.bf16 %v1432, %v1430
        %v1501 = vpack.c.bf16 %v1481, %v1479
        %v1502 = vpack.c.bf16 %v1437, %v1435
        %v1503 = vpack.c.bf16 %v1486, %v1484
        %v1504 = vld [vmem:[#allocation2] sm:$0xff]
        %v1505 = vld [vmem:[#allocation2 + $0x8] sm:$0xff]
        %v1506 = vld [vmem:[#allocation2 + $0x10] sm:$0xff]
        %v1507 = vld [vmem:[#allocation2 + $0x18] sm:$0xff]
        %v1508 = vld [vmem:[#allocation2 + $0x20] sm:$0xff]
        %v1509 = vld [vmem:[#allocation2 + $0x28] sm:$0xff]
        %v1510 = vld [vmem:[#allocation2 + $0x30] sm:$0xff]
        %v1511 = vld [vmem:[#allocation2 + $0x38] sm:$0xff]
        %v1512 = vld [vmem:[#allocation2 + $0x40] sm:$0xff]
        %v1513 = vld [vmem:[#allocation2 + $0x48] sm:$0xff]
        %v1514 = vld [vmem:[#allocation2 + $0x50] sm:$0xff]
        %v1515 = vld [vmem:[#allocation2 + $0x58] sm:$0xff]
        %v1516 = vld [vmem:[#allocation2 + $0x60] sm:$0xff]
        %v1517 = vld [vmem:[#allocation2 + $0x68] sm:$0xff]
        %v1518 = vld [vmem:[#allocation2 + $0x70] sm:$0xff]
        %v1519 = vld [vmem:[#allocation2 + $0x78] sm:$0xff]
        %v1520 = vld [vmem:[#allocation2 + $0x80] sm:$0xff]
        %v1521 = vld [vmem:[#allocation2 + $0x88] sm:$0xff]
        %v1522 = vld [vmem:[#allocation2 + $0x90] sm:$0xff]
        %v1523 = vld [vmem:[#allocation2 + $0x98] sm:$0xff]
        %v1524 = vld [vmem:[#allocation2 + $0xa0] sm:$0xff]
        %v1525 = vld [vmem:[#allocation2 + $0xa8] sm:$0xff]
        %v1526 = vld [vmem:[#allocation2 + $0xb0] sm:$0xff]
        %v1527 = vld [vmem:[#allocation2 + $0xb8] sm:$0xff]
        %v1528 = vld [vmem:[#allocation2 + $0xc0] sm:$0xff]
        %v1529 = vld [vmem:[#allocation2 + $0xc8] sm:$0xff]
        %v1530 = vld [vmem:[#allocation2 + $0xd0] sm:$0xff]
        %v1531 = vld [vmem:[#allocation2 + $0xd8] sm:$0xff]
        %v1532 = vld [vmem:[#allocation2 + $0xe0] sm:$0xff]
        %v1533 = vld [vmem:[#allocation2 + $0xe8] sm:$0xff]
        %v1534 = vld [vmem:[#allocation2 + $0xf0] sm:$0xff]
        %v1535 = vld [vmem:[#allocation2 + $0xf8] sm:$0xff]
        %s1536 = scalar_lea.vmem [#allocation2], 256
        %v1537 = vld [vmem:[%s1536] sm:$0xff]
        %v1538 = vld [vmem:[%s1536 + $0x8] sm:$0xff]
        %v1539 = vld [vmem:[%s1536 + $0x10] sm:$0xff]
        %v1540 = vld [vmem:[%s1536 + $0x18] sm:$0xff]
        %v1541 = vld [vmem:[%s1536 + $0x20] sm:$0xff]
        %v1542 = vld [vmem:[%s1536 + $0x28] sm:$0xff]
        %v1543 = vld [vmem:[%s1536 + $0x30] sm:$0xff]
        %v1544 = vld [vmem:[%s1536 + $0x38] sm:$0xff]
        %v1545 = vld [vmem:[%s1536 + $0x40] sm:$0xff]
        %v1546 = vld [vmem:[%s1536 + $0x48] sm:$0xff]
        %v1547 = vld [vmem:[%s1536 + $0x50] sm:$0xff]
        %v1548 = vld [vmem:[%s1536 + $0x58] sm:$0xff]
        %v1549 = vld [vmem:[%s1536 + $0x60] sm:$0xff]
        %v1550 = vld [vmem:[%s1536 + $0x68] sm:$0xff]
        %v1551 = vld [vmem:[%s1536 + $0x70] sm:$0xff]
        %v1552 = vld [vmem:[%s1536 + $0x78] sm:$0xff]
        %v1553 = vld [vmem:[%s1536 + $0x80] sm:$0xff]
        %v1554 = vld [vmem:[%s1536 + $0x88] sm:$0xff]
        %v1555 = vld [vmem:[%s1536 + $0x90] sm:$0xff]
        %v1556 = vld [vmem:[%s1536 + $0x98] sm:$0xff]
        %v1557 = vld [vmem:[%s1536 + $0xa0] sm:$0xff]
        %v1558 = vld [vmem:[%s1536 + $0xa8] sm:$0xff]
        %v1559 = vld [vmem:[%s1536 + $0xb0] sm:$0xff]
        %v1560 = vld [vmem:[%s1536 + $0xb8] sm:$0xff]
        %v1561 = vld [vmem:[%s1536 + $0xc0] sm:$0xff]
        %v1562 = vld [vmem:[%s1536 + $0xc8] sm:$0xff]
        %v1563 = vld [vmem:[%s1536 + $0xd0] sm:$0xff]
        %v1564 = vld [vmem:[%s1536 + $0xd8] sm:$0xff]
        %v1565 = vld [vmem:[%s1536 + $0xe0] sm:$0xff]
        %v1566 = vld [vmem:[%s1536 + $0xe8] sm:$0xff]
        %v1567 = vld [vmem:[%s1536 + $0xf0] sm:$0xff]
        %v1568 = vld [vmem:[%s1536 + $0xf8] sm:$0xff]
        %v1601 = vunpack.c.l.b16 %v1537
        %v1602 = vunpack.c.h.b16 %v1537
        %v1603 = vunpack.c.l.b16 %v1538
        %v1604 = vunpack.c.h.b16 %v1538
        %v1605 = vunpack.c.l.b16 %v1539
        %v1606 = vunpack.c.h.b16 %v1539
        %v1607 = vunpack.c.l.b16 %v1540
        %v1608 = vunpack.c.h.b16 %v1540
        %v1609 = vunpack.c.l.b16 %v1541
        %v1610 = vunpack.c.h.b16 %v1541
        %v1611 = vunpack.c.l.b16 %v1542
        %v1612 = vunpack.c.h.b16 %v1542
        %v1613 = vunpack.c.l.b16 %v1543
        %v1614 = vunpack.c.h.b16 %v1543
        %v1615 = vunpack.c.l.b16 %v1544
        %v1616 = vunpack.c.h.b16 %v1544
        %v1617 = vunpack.c.l.b16 %v1545
        %v1618 = vunpack.c.h.b16 %v1545
        %v1619 = vunpack.c.l.b16 %v1546
        %v1620 = vunpack.c.h.b16 %v1546
        %v1621 = vunpack.c.l.b16 %v1547
        %v1622 = vunpack.c.h.b16 %v1547
        %v1623 = vunpack.c.l.b16 %v1548
        %v1624 = vunpack.c.h.b16 %v1548
        %v1625 = vunpack.c.l.b16 %v1549
        %v1626 = vunpack.c.h.b16 %v1549
        %v1627 = vunpack.c.l.b16 %v1550
        %v1628 = vunpack.c.h.b16 %v1550
        %v1629 = vunpack.c.l.b16 %v1551
        %v1630 = vunpack.c.h.b16 %v1551
        %v1631 = vunpack.c.l.b16 %v1552
        %v1632 = vunpack.c.h.b16 %v1552
        %v1633 = vunpack.c.l.b16 %v1553
        %v1634 = vunpack.c.h.b16 %v1553
        %v1635 = vunpack.c.l.b16 %v1554
        %v1636 = vunpack.c.h.b16 %v1554
        %v1637 = vunpack.c.l.b16 %v1555
        %v1638 = vunpack.c.h.b16 %v1555
        %v1639 = vunpack.c.l.b16 %v1556
        %v1640 = vunpack.c.h.b16 %v1556
        %v1641 = vunpack.c.l.b16 %v1557
        %v1642 = vunpack.c.h.b16 %v1557
        %v1643 = vunpack.c.l.b16 %v1558
        %v1644 = vunpack.c.h.b16 %v1558
        %v1645 = vunpack.c.l.b16 %v1559
        %v1646 = vunpack.c.h.b16 %v1559
        %v1647 = vunpack.c.l.b16 %v1560
        %v1648 = vunpack.c.h.b16 %v1560
        %v1649 = vunpack.c.l.b16 %v1561
        %v1650 = vunpack.c.h.b16 %v1561
        %v1651 = vunpack.c.l.b16 %v1562
        %v1652 = vunpack.c.h.b16 %v1562
        %v1653 = vunpack.c.l.b16 %v1563
        %v1654 = vunpack.c.h.b16 %v1563
        %v1655 = vunpack.c.l.b16 %v1564
        %v1656 = vunpack.c.h.b16 %v1564
        %v1657 = vunpack.c.l.b16 %v1565
        %v1658 = vunpack.c.h.b16 %v1565
        %v1659 = vunpack.c.l.b16 %v1566
        %v1660 = vunpack.c.h.b16 %v1566
        %v1661 = vunpack.c.l.b16 %v1567
        %v1662 = vunpack.c.h.b16 %v1567
        %v1663 = vunpack.c.l.b16 %v1568
        %v1664 = vunpack.c.h.b16 %v1568
        %v1665 = vpack.c.b16 %v1603, %v1601
        %v1666 = vpack.c.b16 %v1604, %v1602
        %v1667 = vpack.c.b16 %v1607, %v1605
        %v1668 = vpack.c.b16 %v1608, %v1606
        %v1669 = vpack.c.b16 %v1611, %v1609
        %v1670 = vpack.c.b16 %v1612, %v1610
        %v1671 = vpack.c.b16 %v1615, %v1613
        %v1672 = vpack.c.b16 %v1616, %v1614
        %v1673 = vpack.c.b16 %v1619, %v1617
        %v1674 = vpack.c.b16 %v1620, %v1618
        %v1675 = vpack.c.b16 %v1623, %v1621
        %v1676 = vpack.c.b16 %v1624, %v1622
        %v1677 = vpack.c.b16 %v1627, %v1625
        %v1678 = vpack.c.b16 %v1628, %v1626
        %v1679 = vpack.c.b16 %v1631, %v1629
        %v1680 = vpack.c.b16 %v1632, %v1630
        %v1681 = vpack.c.b16 %v1635, %v1633
        %v1682 = vpack.c.b16 %v1636, %v1634
        %v1683 = vpack.c.b16 %v1639, %v1637
        %v1684 = vpack.c.b16 %v1640, %v1638
        %v1685 = vpack.c.b16 %v1643, %v1641
        %v1686 = vpack.c.b16 %v1644, %v1642
        %v1687 = vpack.c.b16 %v1647, %v1645
        %v1688 = vpack.c.b16 %v1648, %v1646
        %v1689 = vpack.c.b16 %v1651, %v1649
        %v1690 = vpack.c.b16 %v1652, %v1650
        %v1691 = vpack.c.b16 %v1655, %v1653
        %v1692 = vpack.c.b16 %v1656, %v1654
        %v1693 = vpack.c.b16 %v1659, %v1657
        %v1694 = vpack.c.b16 %v1660, %v1658
        %v1695 = vpack.c.b16 %v1663, %v1661
        %v1696 = vpack.c.b16 %v1664, %v1662
        %1729 = vmatpush.bf16.msra.mxu0 %v1679
        %1730 = vmatpush.bf16.msra.mxu0 %v1677
        %1731 = vmatpush.bf16.msra.mxu0 %v1675
        %1732 = vmatpush.bf16.msra.mxu0 %v1673
        %1733 = vmatpush.bf16.msra.mxu0 %v1671
        %1734 = vmatpush.bf16.msra.mxu0 %v1669
        %1735 = vmatpush.bf16.msra.mxu0 %v1667
        %1736 = vmatpush.bf16.msra.mxu0 %v1665
        %1737 = vmatmul.bf16.gmra.mxu0 %v966
        %v1738 = vpop.f32.mrf.mxu0
        %v1739 = vadd.f32 0.0, %v1738
        %v1740 = vpop.f32.mrf.mxu0
        %v1741 = vadd.f32 0.0, %v1740
        %1742 = vmatmul.bf16.gmra.mxu0 %v968
        %v1743 = vpop.f32.mrf.mxu0
        %v1744 = vadd.f32 0.0, %v1743
        %v1745 = vpop.f32.mrf.mxu0
        %v1746 = vadd.f32 0.0, %v1745
        %1747 = vmatmul.bf16.gmra.mxu0 %v970
        %v1748 = vpop.f32.mrf.mxu0
        %v1749 = vadd.f32 0.0, %v1748
        %v1750 = vpop.f32.mrf.mxu0
        %v1751 = vadd.f32 0.0, %v1750
        %1752 = vmatmul.bf16.gmra.mxu0 %v972
        %v1753 = vpop.f32.mrf.mxu0
        %v1754 = vadd.f32 0.0, %v1753
        %v1755 = vpop.f32.mrf.mxu0
        %v1756 = vadd.f32 0.0, %v1755
        %1757 = vmatmul.bf16.gmra.mxu0 %v974
        %v1758 = vpop.f32.mrf.mxu0
        %v1759 = vadd.f32 0.0, %v1758
        %v1760 = vpop.f32.mrf.mxu0
        %v1761 = vadd.f32 0.0, %v1760
        %1762 = vmatmul.bf16.gmra.mxu0 %v976
        %v1763 = vpop.f32.mrf.mxu0
        %v1764 = vadd.f32 0.0, %v1763
        %v1765 = vpop.f32.mrf.mxu0
        %v1766 = vadd.f32 0.0, %v1765
        %1767 = vmatmul.bf16.gmra.mxu0 %v978
        %v1768 = vpop.f32.mrf.mxu0
        %v1769 = vadd.f32 0.0, %v1768
        %v1770 = vpop.f32.mrf.mxu0
        %v1771 = vadd.f32 0.0, %v1770
        %1772 = vmatmul.bf16.gmra.mxu0 %v980
        %v1773 = vpop.f32.mrf.mxu0
        %v1774 = vadd.f32 0.0, %v1773
        %v1775 = vpop.f32.mrf.mxu0
        %v1776 = vadd.f32 0.0, %v1775
        %1777 = vdwg.mxu0
        %1778 = vmatpush.bf16.msra.mxu0 %v1695
        %1779 = vmatpush.bf16.msra.mxu0 %v1693
        %1780 = vmatpush.bf16.msra.mxu0 %v1691
        %1781 = vmatpush.bf16.msra.mxu0 %v1689
        %1782 = vmatpush.bf16.msra.mxu0 %v1687
        %1783 = vmatpush.bf16.msra.mxu0 %v1685
        %1784 = vmatpush.bf16.msra.mxu0 %v1683
        %1785 = vmatpush.bf16.msra.mxu0 %v1681
        %1786 = vmatmul.bf16.gmra.mxu0 %v967
        %v1787 = vpop.f32.mrf.mxu0
        %v1788 = vadd.f32 %v1739, %v1787
        %v1789 = vpop.f32.mrf.mxu0
        %v1790 = vadd.f32 %v1741, %v1789
        %1791 = vmatmul.bf16.gmra.mxu0 %v969
        %v1792 = vpop.f32.mrf.mxu0
        %v1793 = vadd.f32 %v1744, %v1792
        %v1794 = vpop.f32.mrf.mxu0
        %v1795 = vadd.f32 %v1746, %v1794
        %1796 = vmatmul.bf16.gmra.mxu0 %v971
        %v1797 = vpop.f32.mrf.mxu0
        %v1798 = vadd.f32 %v1749, %v1797
        %v1799 = vpop.f32.mrf.mxu0
        %v1800 = vadd.f32 %v1751, %v1799
        %1801 = vmatmul.bf16.gmra.mxu0 %v973
        %v1802 = vpop.f32.mrf.mxu0
        %v1803 = vadd.f32 %v1754, %v1802
        %v1804 = vpop.f32.mrf.mxu0
        %v1805 = vadd.f32 %v1756, %v1804
        %1806 = vmatmul.bf16.gmra.mxu0 %v975
        %v1807 = vpop.f32.mrf.mxu0
        %v1808 = vadd.f32 %v1759, %v1807
        %v1809 = vpop.f32.mrf.mxu0
        %v1810 = vadd.f32 %v1761, %v1809
        %1811 = vmatmul.bf16.gmra.mxu0 %v977
        %v1812 = vpop.f32.mrf.mxu0
        %v1813 = vadd.f32 %v1764, %v1812
        %v1814 = vpop.f32.mrf.mxu0
        %v1815 = vadd.f32 %v1766, %v1814
        %1816 = vmatmul.bf16.gmra.mxu0 %v979
        %v1817 = vpop.f32.mrf.mxu0
        %v1818 = vadd.f32 %v1769, %v1817
        %v1819 = vpop.f32.mrf.mxu0
        %v1820 = vadd.f32 %v1771, %v1819
        %1821 = vmatmul.bf16.gmra.mxu0 %v981
        %v1822 = vpop.f32.mrf.mxu0
        %v1823 = vadd.f32 %v1774, %v1822
        %v1824 = vpop.f32.mrf.mxu0
        %v1825 = vadd.f32 %v1776, %v1824
        %1826 = vdwg.mxu0
        %1827 = vmatpush.bf16.msra.mxu0 %v1680
        %1828 = vmatpush.bf16.msra.mxu0 %v1678
        %1829 = vmatpush.bf16.msra.mxu0 %v1676
        %1830 = vmatpush.bf16.msra.mxu0 %v1674
        %1831 = vmatpush.bf16.msra.mxu0 %v1672
        %1832 = vmatpush.bf16.msra.mxu0 %v1670
        %1833 = vmatpush.bf16.msra.mxu0 %v1668
        %1834 = vmatpush.bf16.msra.mxu0 %v1666
        %1835 = vmatmul.bf16.gmra.mxu0 %v966
        %v1836 = vpop.f32.mrf.mxu0
        %v1837 = vadd.f32 0.0, %v1836
        %v1838 = vpop.f32.mrf.mxu0
        %v1839 = vadd.f32 0.0, %v1838
        %1840 = vmatmul.bf16.gmra.mxu0 %v968
        %v1841 = vpop.f32.mrf.mxu0
        %v1842 = vadd.f32 0.0, %v1841
        %v1843 = vpop.f32.mrf.mxu0
        %v1844 = vadd.f32 0.0, %v1843
        %1845 = vmatmul.bf16.gmra.mxu0 %v970
        %v1846 = vpop.f32.mrf.mxu0
        %v1847 = vadd.f32 0.0, %v1846
        %v1848 = vpop.f32.mrf.mxu0
        %v1849 = vadd.f32 0.0, %v1848
        %1850 = vmatmul.bf16.gmra.mxu0 %v972
        %v1851 = vpop.f32.mrf.mxu0
        %v1852 = vadd.f32 0.0, %v1851
        %v1853 = vpop.f32.mrf.mxu0
        %v1854 = vadd.f32 0.0, %v1853
        %1855 = vmatmul.bf16.gmra.mxu0 %v974
        %v1856 = vpop.f32.mrf.mxu0
        %v1857 = vadd.f32 0.0, %v1856
        %v1858 = vpop.f32.mrf.mxu0
        %v1859 = vadd.f32 0.0, %v1858
        %1860 = vmatmul.bf16.gmra.mxu0 %v976
        %v1861 = vpop.f32.mrf.mxu0
        %v1862 = vadd.f32 0.0, %v1861
        %v1863 = vpop.f32.mrf.mxu0
        %v1864 = vadd.f32 0.0, %v1863
        %1865 = vmatmul.bf16.gmra.mxu0 %v978
        %v1866 = vpop.f32.mrf.mxu0
        %v1867 = vadd.f32 0.0, %v1866
        %v1868 = vpop.f32.mrf.mxu0
        %v1869 = vadd.f32 0.0, %v1868
        %1870 = vmatmul.bf16.gmra.mxu0 %v980
        %v1871 = vpop.f32.mrf.mxu0
        %v1872 = vadd.f32 0.0, %v1871
        %v1873 = vpop.f32.mrf.mxu0
        %v1874 = vadd.f32 0.0, %v1873
        %1875 = vdwg.mxu0
        %1876 = vmatpush.bf16.msra.mxu0 %v1696
        %1877 = vmatpush.bf16.msra.mxu0 %v1694
        %1878 = vmatpush.bf16.msra.mxu0 %v1692
        %1879 = vmatpush.bf16.msra.mxu0 %v1690
        %1880 = vmatpush.bf16.msra.mxu0 %v1688
        %1881 = vmatpush.bf16.msra.mxu0 %v1686
        %1882 = vmatpush.bf16.msra.mxu0 %v1684
        %1883 = vmatpush.bf16.msra.mxu0 %v1682
        %1884 = vmatmul.bf16.gmra.mxu0 %v967
        %v1885 = vpop.f32.mrf.mxu0
        %v1886 = vadd.f32 %v1837, %v1885
        %v1887 = vpop.f32.mrf.mxu0
        %v1888 = vadd.f32 %v1839, %v1887
        %1889 = vmatmul.bf16.gmra.mxu0 %v969
        %v1890 = vpop.f32.mrf.mxu0
        %v1891 = vadd.f32 %v1842, %v1890
        %v1892 = vpop.f32.mrf.mxu0
        %v1893 = vadd.f32 %v1844, %v1892
        %1894 = vmatmul.bf16.gmra.mxu0 %v971
        %v1895 = vpop.f32.mrf.mxu0
        %v1896 = vadd.f32 %v1847, %v1895
        %v1897 = vpop.f32.mrf.mxu0
        %v1898 = vadd.f32 %v1849, %v1897
        %1899 = vmatmul.bf16.gmra.mxu0 %v973
        %v1900 = vpop.f32.mrf.mxu0
        %v1901 = vadd.f32 %v1852, %v1900
        %v1902 = vpop.f32.mrf.mxu0
        %v1903 = vadd.f32 %v1854, %v1902
        %1904 = vmatmul.bf16.gmra.mxu0 %v975
        %v1905 = vpop.f32.mrf.mxu0
        %v1906 = vadd.f32 %v1857, %v1905
        %v1907 = vpop.f32.mrf.mxu0
        %v1908 = vadd.f32 %v1859, %v1907
        %1909 = vmatmul.bf16.gmra.mxu0 %v977
        %v1910 = vpop.f32.mrf.mxu0
        %v1911 = vadd.f32 %v1862, %v1910
        %v1912 = vpop.f32.mrf.mxu0
        %v1913 = vadd.f32 %v1864, %v1912
        %1914 = vmatmul.bf16.gmra.mxu0 %v979
        %v1915 = vpop.f32.mrf.mxu0
        %v1916 = vadd.f32 %v1867, %v1915
        %v1917 = vpop.f32.mrf.mxu0
        %v1918 = vadd.f32 %v1869, %v1917
        %1919 = vmatmul.bf16.gmra.mxu0 %v981
        %v1920 = vpop.f32.mrf.mxu0
        %v1921 = vadd.f32 %v1872, %v1920
        %v1922 = vpop.f32.mrf.mxu0
        %v1923 = vadd.f32 %v1874, %v1922
        %1924 = vdwg.mxu0
        %v1957 = vunpack.c.l.b16 %v1504
        %v1958 = vunpack.c.h.b16 %v1504
        %v1959 = vunpack.c.l.b16 %v1505
        %v1960 = vunpack.c.h.b16 %v1505
        %v1961 = vunpack.c.l.b16 %v1506
        %v1962 = vunpack.c.h.b16 %v1506
        %v1963 = vunpack.c.l.b16 %v1507
        %v1964 = vunpack.c.h.b16 %v1507
        %v1965 = vunpack.c.l.b16 %v1508
        %v1966 = vunpack.c.h.b16 %v1508
        %v1967 = vunpack.c.l.b16 %v1509
        %v1968 = vunpack.c.h.b16 %v1509
        %v1969 = vunpack.c.l.b16 %v1510
        %v1970 = vunpack.c.h.b16 %v1510
        %v1971 = vunpack.c.l.b16 %v1511
        %v1972 = vunpack.c.h.b16 %v1511
        %v1973 = vunpack.c.l.b16 %v1512
        %v1974 = vunpack.c.h.b16 %v1512
        %v1975 = vunpack.c.l.b16 %v1513
        %v1976 = vunpack.c.h.b16 %v1513
        %v1977 = vunpack.c.l.b16 %v1514
        %v1978 = vunpack.c.h.b16 %v1514
        %v1979 = vunpack.c.l.b16 %v1515
        %v1980 = vunpack.c.h.b16 %v1515
        %v1981 = vunpack.c.l.b16 %v1516
        %v1982 = vunpack.c.h.b16 %v1516
        %v1983 = vunpack.c.l.b16 %v1517
        %v1984 = vunpack.c.h.b16 %v1517
        %v1985 = vunpack.c.l.b16 %v1518
        %v1986 = vunpack.c.h.b16 %v1518
        %v1987 = vunpack.c.l.b16 %v1519
        %v1988 = vunpack.c.h.b16 %v1519
        %v1989 = vunpack.c.l.b16 %v1520
        %v1990 = vunpack.c.h.b16 %v1520
        %v1991 = vunpack.c.l.b16 %v1521
        %v1992 = vunpack.c.h.b16 %v1521
        %v1993 = vunpack.c.l.b16 %v1522
        %v1994 = vunpack.c.h.b16 %v1522
        %v1995 = vunpack.c.l.b16 %v1523
        %v1996 = vunpack.c.h.b16 %v1523
        %v1997 = vunpack.c.l.b16 %v1524
        %v1998 = vunpack.c.h.b16 %v1524
        %v1999 = vunpack.c.l.b16 %v1525
        %v2000 = vunpack.c.h.b16 %v1525
        %v2001 = vunpack.c.l.b16 %v1526
        %v2002 = vunpack.c.h.b16 %v1526
        %v2003 = vunpack.c.l.b16 %v1527
        %v2004 = vunpack.c.h.b16 %v1527
        %v2005 = vunpack.c.l.b16 %v1528
        %v2006 = vunpack.c.h.b16 %v1528
        %v2007 = vunpack.c.l.b16 %v1529
        %v2008 = vunpack.c.h.b16 %v1529
        %v2009 = vunpack.c.l.b16 %v1530
        %v2010 = vunpack.c.h.b16 %v1530
        %v2011 = vunpack.c.l.b16 %v1531
        %v2012 = vunpack.c.h.b16 %v1531
        %v2013 = vunpack.c.l.b16 %v1532
        %v2014 = vunpack.c.h.b16 %v1532
        %v2015 = vunpack.c.l.b16 %v1533
        %v2016 = vunpack.c.h.b16 %v1533
        %v2017 = vunpack.c.l.b16 %v1534
        %v2018 = vunpack.c.h.b16 %v1534
        %v2019 = vunpack.c.l.b16 %v1535
        %v2020 = vunpack.c.h.b16 %v1535
        %v2021 = vpack.c.b16 %v1959, %v1957
        %v2022 = vpack.c.b16 %v1960, %v1958
        %v2023 = vpack.c.b16 %v1963, %v1961
        %v2024 = vpack.c.b16 %v1964, %v1962
        %v2025 = vpack.c.b16 %v1967, %v1965
        %v2026 = vpack.c.b16 %v1968, %v1966
        %v2027 = vpack.c.b16 %v1971, %v1969
        %v2028 = vpack.c.b16 %v1972, %v1970
        %v2029 = vpack.c.b16 %v1975, %v1973
        %v2030 = vpack.c.b16 %v1976, %v1974
        %v2031 = vpack.c.b16 %v1979, %v1977
        %v2032 = vpack.c.b16 %v1980, %v1978
        %v2033 = vpack.c.b16 %v1983, %v1981
        %v2034 = vpack.c.b16 %v1984, %v1982
        %v2035 = vpack.c.b16 %v1987, %v1985
        %v2036 = vpack.c.b16 %v1988, %v1986
        %v2037 = vpack.c.b16 %v1991, %v1989
        %v2038 = vpack.c.b16 %v1992, %v1990
        %v2039 = vpack.c.b16 %v1995, %v1993
        %v2040 = vpack.c.b16 %v1996, %v1994
        %v2041 = vpack.c.b16 %v1999, %v1997
        %v2042 = vpack.c.b16 %v2000, %v1998
        %v2043 = vpack.c.b16 %v2003, %v2001
        %v2044 = vpack.c.b16 %v2004, %v2002
        %v2045 = vpack.c.b16 %v2007, %v2005
        %v2046 = vpack.c.b16 %v2008, %v2006
        %v2047 = vpack.c.b16 %v2011, %v2009
        %v2048 = vpack.c.b16 %v2012, %v2010
        %v2049 = vpack.c.b16 %v2015, %v2013
        %v2050 = vpack.c.b16 %v2016, %v2014
        %v2051 = vpack.c.b16 %v2019, %v2017
        %v2052 = vpack.c.b16 %v2020, %v2018
        %2085 = vmatpush.bf16.msra.mxu0 %v2035
        %2086 = vmatpush.bf16.msra.mxu0 %v2033
        %2087 = vmatpush.bf16.msra.mxu0 %v2031
        %2088 = vmatpush.bf16.msra.mxu0 %v2029
        %2089 = vmatpush.bf16.msra.mxu0 %v2027
        %2090 = vmatpush.bf16.msra.mxu0 %v2025
        %2091 = vmatpush.bf16.msra.mxu0 %v2023
        %2092 = vmatpush.bf16.msra.mxu0 %v2021
        %2093 = vmatmul.bf16.gmra.mxu0 %v705
        %v2094 = vpop.f32.mrf.mxu0
        %v2095 = vadd.f32 %v1788, %v2094
        %v2096 = vpop.f32.mrf.mxu0
        %v2097 = vadd.f32 %v1790, %v2096
        %2098 = vmatmul.bf16.gmra.mxu0 %v707
        %v2099 = vpop.f32.mrf.mxu0
        %v2100 = vadd.f32 %v1793, %v2099
        %v2101 = vpop.f32.mrf.mxu0
        %v2102 = vadd.f32 %v1795, %v2101
        %2103 = vmatmul.bf16.gmra.mxu0 %v709
        %v2104 = vpop.f32.mrf.mxu0
        %v2105 = vadd.f32 %v1798, %v2104
        %v2106 = vpop.f32.mrf.mxu0
        %v2107 = vadd.f32 %v1800, %v2106
        %2108 = vmatmul.bf16.gmra.mxu0 %v711
        %v2109 = vpop.f32.mrf.mxu0
        %v2110 = vadd.f32 %v1803, %v2109
        %v2111 = vpop.f32.mrf.mxu0
        %v2112 = vadd.f32 %v1805, %v2111
        %2113 = vmatmul.bf16.gmra.mxu0 %v713
        %v2114 = vpop.f32.mrf.mxu0
        %v2115 = vadd.f32 %v1808, %v2114
        %v2116 = vpop.f32.mrf.mxu0
        %v2117 = vadd.f32 %v1810, %v2116
        %2118 = vmatmul.bf16.gmra.mxu0 %v715
        %v2119 = vpop.f32.mrf.mxu0
        %v2120 = vadd.f32 %v1813, %v2119
        %v2121 = vpop.f32.mrf.mxu0
        %v2122 = vadd.f32 %v1815, %v2121
        %2123 = vmatmul.bf16.gmra.mxu0 %v717
        %v2124 = vpop.f32.mrf.mxu0
        %v2125 = vadd.f32 %v1818, %v2124
        %v2126 = vpop.f32.mrf.mxu0
        %v2127 = vadd.f32 %v1820, %v2126
        %2128 = vmatmul.bf16.gmra.mxu0 %v719
        %v2129 = vpop.f32.mrf.mxu0
        %v2130 = vadd.f32 %v1823, %v2129
        %v2131 = vpop.f32.mrf.mxu0
        %v2132 = vadd.f32 %v1825, %v2131
        %2133 = vdwg.mxu0
        %2134 = vmatpush.bf16.msra.mxu0 %v2051
        %2135 = vmatpush.bf16.msra.mxu0 %v2049
        %2136 = vmatpush.bf16.msra.mxu0 %v2047
        %2137 = vmatpush.bf16.msra.mxu0 %v2045
        %2138 = vmatpush.bf16.msra.mxu0 %v2043
        %2139 = vmatpush.bf16.msra.mxu0 %v2041
        %2140 = vmatpush.bf16.msra.mxu0 %v2039
        %2141 = vmatpush.bf16.msra.mxu0 %v2037
        %2142 = vmatmul.bf16.gmra.mxu0 %v706
        %v2143 = vpop.f32.mrf.mxu0
        %v2144 = vadd.f32 %v2095, %v2143
        %v2145 = vpop.f32.mrf.mxu0
        %v2146 = vadd.f32 %v2097, %v2145
        %2147 = vmatmul.bf16.gmra.mxu0 %v708
        %v2148 = vpop.f32.mrf.mxu0
        %v2149 = vadd.f32 %v2100, %v2148
        %v2150 = vpop.f32.mrf.mxu0
        %v2151 = vadd.f32 %v2102, %v2150
        %2152 = vmatmul.bf16.gmra.mxu0 %v710
        %v2153 = vpop.f32.mrf.mxu0
        %v2154 = vadd.f32 %v2105, %v2153
        %v2155 = vpop.f32.mrf.mxu0
        %v2156 = vadd.f32 %v2107, %v2155
        %2157 = vmatmul.bf16.gmra.mxu0 %v712
        %v2158 = vpop.f32.mrf.mxu0
        %v2159 = vadd.f32 %v2110, %v2158
        %v2160 = vpop.f32.mrf.mxu0
        %v2161 = vadd.f32 %v2112, %v2160
        %2162 = vmatmul.bf16.gmra.mxu0 %v714
        %v2163 = vpop.f32.mrf.mxu0
        %v2164 = vadd.f32 %v2115, %v2163
        %v2165 = vpop.f32.mrf.mxu0
        %v2166 = vadd.f32 %v2117, %v2165
        %2167 = vmatmul.bf16.gmra.mxu0 %v716
        %v2168 = vpop.f32.mrf.mxu0
        %v2169 = vadd.f32 %v2120, %v2168
        %v2170 = vpop.f32.mrf.mxu0
        %v2171 = vadd.f32 %v2122, %v2170
        %2172 = vmatmul.bf16.gmra.mxu0 %v718
        %v2173 = vpop.f32.mrf.mxu0
        %v2174 = vadd.f32 %v2125, %v2173
        %v2175 = vpop.f32.mrf.mxu0
        %v2176 = vadd.f32 %v2127, %v2175
        %2177 = vmatmul.bf16.gmra.mxu0 %v720
        %v2178 = vpop.f32.mrf.mxu0
        %v2179 = vadd.f32 %v2130, %v2178
        %v2180 = vpop.f32.mrf.mxu0
        %v2181 = vadd.f32 %v2132, %v2180
        %2182 = vdwg.mxu0
        %2183 = vmatpush.bf16.msra.mxu0 %v2036
        %2184 = vmatpush.bf16.msra.mxu0 %v2034
        %2185 = vmatpush.bf16.msra.mxu0 %v2032
        %2186 = vmatpush.bf16.msra.mxu0 %v2030
        %2187 = vmatpush.bf16.msra.mxu0 %v2028
        %2188 = vmatpush.bf16.msra.mxu0 %v2026
        %2189 = vmatpush.bf16.msra.mxu0 %v2024
        %2190 = vmatpush.bf16.msra.mxu0 %v2022
        %2191 = vmatmul.bf16.gmra.mxu0 %v705
        %v2192 = vpop.f32.mrf.mxu0
        %v2193 = vadd.f32 %v1886, %v2192
        %v2194 = vpop.f32.mrf.mxu0
        %v2195 = vadd.f32 %v1888, %v2194
        %2196 = vmatmul.bf16.gmra.mxu0 %v707
        %v2197 = vpop.f32.mrf.mxu0
        %v2198 = vadd.f32 %v1891, %v2197
        %v2199 = vpop.f32.mrf.mxu0
        %v2200 = vadd.f32 %v1893, %v2199
        %2201 = vmatmul.bf16.gmra.mxu0 %v709
        %v2202 = vpop.f32.mrf.mxu0
        %v2203 = vadd.f32 %v1896, %v2202
        %v2204 = vpop.f32.mrf.mxu0
        %v2205 = vadd.f32 %v1898, %v2204
        %2206 = vmatmul.bf16.gmra.mxu0 %v711
        %v2207 = vpop.f32.mrf.mxu0
        %v2208 = vadd.f32 %v1901, %v2207
        %v2209 = vpop.f32.mrf.mxu0
        %v2210 = vadd.f32 %v1903, %v2209
        %2211 = vmatmul.bf16.gmra.mxu0 %v713
        %v2212 = vpop.f32.mrf.mxu0
        %v2213 = vadd.f32 %v1906, %v2212
        %v2214 = vpop.f32.mrf.mxu0
        %v2215 = vadd.f32 %v1908, %v2214
        %2216 = vmatmul.bf16.gmra.mxu0 %v715
        %v2217 = vpop.f32.mrf.mxu0
        %v2218 = vadd.f32 %v1911, %v2217
        %v2219 = vpop.f32.mrf.mxu0
        %v2220 = vadd.f32 %v1913, %v2219
        %2221 = vmatmul.bf16.gmra.mxu0 %v717
        %v2222 = vpop.f32.mrf.mxu0
        %v2223 = vadd.f32 %v1916, %v2222
        %v2224 = vpop.f32.mrf.mxu0
        %v2225 = vadd.f32 %v1918, %v2224
        %2226 = vmatmul.bf16.gmra.mxu0 %v719
        %v2227 = vpop.f32.mrf.mxu0
        %v2228 = vadd.f32 %v1921, %v2227
        %v2229 = vpop.f32.mrf.mxu0
        %v2230 = vadd.f32 %v1923, %v2229
        %2231 = vdwg.mxu0
        %2232 = vmatpush.bf16.msra.mxu0 %v2052
        %2233 = vmatpush.bf16.msra.mxu0 %v2050
        %2234 = vmatpush.bf16.msra.mxu0 %v2048
        %2235 = vmatpush.bf16.msra.mxu0 %v2046
        %2236 = vmatpush.bf16.msra.mxu0 %v2044
        %2237 = vmatpush.bf16.msra.mxu0 %v2042
        %2238 = vmatpush.bf16.msra.mxu0 %v2040
        %2239 = vmatpush.bf16.msra.mxu0 %v2038
        %2240 = vmatmul.bf16.gmra.mxu0 %v706
        %v2241 = vpop.f32.mrf.mxu0
        %v2242 = vadd.f32 %v2193, %v2241
        %v2243 = vpop.f32.mrf.mxu0
        %v2244 = vadd.f32 %v2195, %v2243
        %2245 = vmatmul.bf16.gmra.mxu0 %v708
        %v2246 = vpop.f32.mrf.mxu0
        %v2247 = vadd.f32 %v2198, %v2246
        %v2248 = vpop.f32.mrf.mxu0
        %v2249 = vadd.f32 %v2200, %v2248
        %2250 = vmatmul.bf16.gmra.mxu0 %v710
        %v2251 = vpop.f32.mrf.mxu0
        %v2252 = vadd.f32 %v2203, %v2251
        %v2253 = vpop.f32.mrf.mxu0
        %v2254 = vadd.f32 %v2205, %v2253
        %2255 = vmatmul.bf16.gmra.mxu0 %v712
        %v2256 = vpop.f32.mrf.mxu0
        %v2257 = vadd.f32 %v2208, %v2256
        %v2258 = vpop.f32.mrf.mxu0
        %v2259 = vadd.f32 %v2210, %v2258
        %2260 = vmatmul.bf16.gmra.mxu0 %v714
        %v2261 = vpop.f32.mrf.mxu0
        %v2262 = vadd.f32 %v2213, %v2261
        %v2263 = vpop.f32.mrf.mxu0
        %v2264 = vadd.f32 %v2215, %v2263
        %2265 = vmatmul.bf16.gmra.mxu0 %v716
        %v2266 = vpop.f32.mrf.mxu0
        %v2267 = vadd.f32 %v2218, %v2266
        %v2268 = vpop.f32.mrf.mxu0
        %v2269 = vadd.f32 %v2220, %v2268
        %2270 = vmatmul.bf16.gmra.mxu0 %v718
        %v2271 = vpop.f32.mrf.mxu0
        %v2272 = vadd.f32 %v2223, %v2271
        %v2273 = vpop.f32.mrf.mxu0
        %v2274 = vadd.f32 %v2225, %v2273
        %2275 = vmatmul.bf16.gmra.mxu0 %v720
        %v2276 = vpop.f32.mrf.mxu0
        %v2277 = vadd.f32 %v2228, %v2276
        %v2278 = vpop.f32.mrf.mxu0
        %v2279 = vadd.f32 %v2230, %v2278
        %2280 = vdwg.mxu0
        %s2281 = scalar_lea.vmem [#allocation2], 512
        %v2282 = vld [vmem:[%s2281] sm:$0xff]
        %v2283 = vld [vmem:[%s2281 + $0x8] sm:$0xff]
        %v2284 = vld [vmem:[%s2281 + $0x10] sm:$0xff]
        %v2285 = vld [vmem:[%s2281 + $0x18] sm:$0xff]
        %v2286 = vld [vmem:[%s2281 + $0x20] sm:$0xff]
        %v2287 = vld [vmem:[%s2281 + $0x28] sm:$0xff]
        %v2288 = vld [vmem:[%s2281 + $0x30] sm:$0xff]
        %v2289 = vld [vmem:[%s2281 + $0x38] sm:$0xff]
        %v2290 = vld [vmem:[%s2281 + $0x40] sm:$0xff]
        %v2291 = vld [vmem:[%s2281 + $0x48] sm:$0xff]
        %v2292 = vld [vmem:[%s2281 + $0x50] sm:$0xff]
        %v2293 = vld [vmem:[%s2281 + $0x58] sm:$0xff]
        %v2294 = vld [vmem:[%s2281 + $0x60] sm:$0xff]
        %v2295 = vld [vmem:[%s2281 + $0x68] sm:$0xff]
        %v2296 = vld [vmem:[%s2281 + $0x70] sm:$0xff]
        %v2297 = vld [vmem:[%s2281 + $0x78] sm:$0xff]
        %v2298 = vld [vmem:[%s2281 + $0x80] sm:$0xff]
        %v2299 = vld [vmem:[%s2281 + $0x88] sm:$0xff]
        %v2300 = vld [vmem:[%s2281 + $0x90] sm:$0xff]
        %v2301 = vld [vmem:[%s2281 + $0x98] sm:$0xff]
        %v2302 = vld [vmem:[%s2281 + $0xa0] sm:$0xff]
        %v2303 = vld [vmem:[%s2281 + $0xa8] sm:$0xff]
        %v2304 = vld [vmem:[%s2281 + $0xb0] sm:$0xff]
        %v2305 = vld [vmem:[%s2281 + $0xb8] sm:$0xff]
        %v2306 = vld [vmem:[%s2281 + $0xc0] sm:$0xff]
        %v2307 = vld [vmem:[%s2281 + $0xc8] sm:$0xff]
        %v2308 = vld [vmem:[%s2281 + $0xd0] sm:$0xff]
        %v2309 = vld [vmem:[%s2281 + $0xd8] sm:$0xff]
        %v2310 = vld [vmem:[%s2281 + $0xe0] sm:$0xff]
        %v2311 = vld [vmem:[%s2281 + $0xe8] sm:$0xff]
        %v2312 = vld [vmem:[%s2281 + $0xf0] sm:$0xff]
        %v2313 = vld [vmem:[%s2281 + $0xf8] sm:$0xff]
        %v2346 = vunpack.c.l.b16 %v2282
        %v2347 = vunpack.c.h.b16 %v2282
        %v2348 = vunpack.c.l.b16 %v2283
        %v2349 = vunpack.c.h.b16 %v2283
        %v2350 = vunpack.c.l.b16 %v2284
        %v2351 = vunpack.c.h.b16 %v2284
        %v2352 = vunpack.c.l.b16 %v2285
        %v2353 = vunpack.c.h.b16 %v2285
        %v2354 = vunpack.c.l.b16 %v2286
        %v2355 = vunpack.c.h.b16 %v2286
        %v2356 = vunpack.c.l.b16 %v2287
        %v2357 = vunpack.c.h.b16 %v2287
        %v2358 = vunpack.c.l.b16 %v2288
        %v2359 = vunpack.c.h.b16 %v2288
        %v2360 = vunpack.c.l.b16 %v2289
        %v2361 = vunpack.c.h.b16 %v2289
        %v2362 = vunpack.c.l.b16 %v2290
        %v2363 = vunpack.c.h.b16 %v2290
        %v2364 = vunpack.c.l.b16 %v2291
        %v2365 = vunpack.c.h.b16 %v2291
        %v2366 = vunpack.c.l.b16 %v2292
        %v2367 = vunpack.c.h.b16 %v2292
        %v2368 = vunpack.c.l.b16 %v2293
        %v2369 = vunpack.c.h.b16 %v2293
        %v2370 = vunpack.c.l.b16 %v2294
        %v2371 = vunpack.c.h.b16 %v2294
        %v2372 = vunpack.c.l.b16 %v2295
        %v2373 = vunpack.c.h.b16 %v2295
        %v2374 = vunpack.c.l.b16 %v2296
        %v2375 = vunpack.c.h.b16 %v2296
        %v2376 = vunpack.c.l.b16 %v2297
        %v2377 = vunpack.c.h.b16 %v2297
        %v2378 = vunpack.c.l.b16 %v2298
        %v2379 = vunpack.c.h.b16 %v2298
        %v2380 = vunpack.c.l.b16 %v2299
        %v2381 = vunpack.c.h.b16 %v2299
        %v2382 = vunpack.c.l.b16 %v2300
        %v2383 = vunpack.c.h.b16 %v2300
        %v2384 = vunpack.c.l.b16 %v2301
        %v2385 = vunpack.c.h.b16 %v2301
        %v2386 = vunpack.c.l.b16 %v2302
        %v2387 = vunpack.c.h.b16 %v2302
        %v2388 = vunpack.c.l.b16 %v2303
        %v2389 = vunpack.c.h.b16 %v2303
        %v2390 = vunpack.c.l.b16 %v2304
        %v2391 = vunpack.c.h.b16 %v2304
        %v2392 = vunpack.c.l.b16 %v2305
        %v2393 = vunpack.c.h.b16 %v2305
        %v2394 = vunpack.c.l.b16 %v2306
        %v2395 = vunpack.c.h.b16 %v2306
        %v2396 = vunpack.c.l.b16 %v2307
        %v2397 = vunpack.c.h.b16 %v2307
        %v2398 = vunpack.c.l.b16 %v2308
        %v2399 = vunpack.c.h.b16 %v2308
        %v2400 = vunpack.c.l.b16 %v2309
        %v2401 = vunpack.c.h.b16 %v2309
        %v2402 = vunpack.c.l.b16 %v2310
        %v2403 = vunpack.c.h.b16 %v2310
        %v2404 = vunpack.c.l.b16 %v2311
        %v2405 = vunpack.c.h.b16 %v2311
        %v2406 = vunpack.c.l.b16 %v2312
        %v2407 = vunpack.c.h.b16 %v2312
        %v2408 = vunpack.c.l.b16 %v2313
        %v2409 = vunpack.c.h.b16 %v2313
        %v2410 = vpack.c.b16 %v2348, %v2346
        %v2411 = vpack.c.b16 %v2349, %v2347
        %v2412 = vpack.c.b16 %v2352, %v2350
        %v2413 = vpack.c.b16 %v2353, %v2351
        %v2414 = vpack.c.b16 %v2356, %v2354
        %v2415 = vpack.c.b16 %v2357, %v2355
        %v2416 = vpack.c.b16 %v2360, %v2358
        %v2417 = vpack.c.b16 %v2361, %v2359
        %v2418 = vpack.c.b16 %v2364, %v2362
        %v2419 = vpack.c.b16 %v2365, %v2363
        %v2420 = vpack.c.b16 %v2368, %v2366
        %v2421 = vpack.c.b16 %v2369, %v2367
        %v2422 = vpack.c.b16 %v2372, %v2370
        %v2423 = vpack.c.b16 %v2373, %v2371
        %v2424 = vpack.c.b16 %v2376, %v2374
        %v2425 = vpack.c.b16 %v2377, %v2375
        %v2426 = vpack.c.b16 %v2380, %v2378
        %v2427 = vpack.c.b16 %v2381, %v2379
        %v2428 = vpack.c.b16 %v2384, %v2382
        %v2429 = vpack.c.b16 %v2385, %v2383
        %v2430 = vpack.c.b16 %v2388, %v2386
        %v2431 = vpack.c.b16 %v2389, %v2387
        %v2432 = vpack.c.b16 %v2392, %v2390
        %v2433 = vpack.c.b16 %v2393, %v2391
        %v2434 = vpack.c.b16 %v2396, %v2394
        %v2435 = vpack.c.b16 %v2397, %v2395
        %v2436 = vpack.c.b16 %v2400, %v2398
        %v2437 = vpack.c.b16 %v2401, %v2399
        %v2438 = vpack.c.b16 %v2404, %v2402
        %v2439 = vpack.c.b16 %v2405, %v2403
        %v2440 = vpack.c.b16 %v2408, %v2406
        %v2441 = vpack.c.b16 %v2409, %v2407
        %2474 = vmatpush.bf16.msra.mxu0 %v2424
        %2475 = vmatpush.bf16.msra.mxu0 %v2422
        %2476 = vmatpush.bf16.msra.mxu0 %v2420
        %2477 = vmatpush.bf16.msra.mxu0 %v2418
        %2478 = vmatpush.bf16.msra.mxu0 %v2416
        %2479 = vmatpush.bf16.msra.mxu0 %v2414
        %2480 = vmatpush.bf16.msra.mxu0 %v2412
        %2481 = vmatpush.bf16.msra.mxu0 %v2410
        %2482 = vmatmul.bf16.gmra.mxu0 %v1227
        %v2483 = vpop.f32.mrf.mxu0
        %v2484 = vadd.f32 0.0, %v2483
        %v2485 = vpop.f32.mrf.mxu0
        %v2486 = vadd.f32 0.0, %v2485
        %2487 = vmatmul.bf16.gmra.mxu0 %v1229
        %v2488 = vpop.f32.mrf.mxu0
        %v2489 = vadd.f32 0.0, %v2488
        %v2490 = vpop.f32.mrf.mxu0
        %v2491 = vadd.f32 0.0, %v2490
        %2492 = vmatmul.bf16.gmra.mxu0 %v1231
        %v2493 = vpop.f32.mrf.mxu0
        %v2494 = vadd.f32 0.0, %v2493
        %v2495 = vpop.f32.mrf.mxu0
        %v2496 = vadd.f32 0.0, %v2495
        %2497 = vmatmul.bf16.gmra.mxu0 %v1233
        %v2498 = vpop.f32.mrf.mxu0
        %v2499 = vadd.f32 0.0, %v2498
        %v2500 = vpop.f32.mrf.mxu0
        %v2501 = vadd.f32 0.0, %v2500
        %2502 = vmatmul.bf16.gmra.mxu0 %v1235
        %v2503 = vpop.f32.mrf.mxu0
        %v2504 = vadd.f32 0.0, %v2503
        %v2505 = vpop.f32.mrf.mxu0
        %v2506 = vadd.f32 0.0, %v2505
        %2507 = vmatmul.bf16.gmra.mxu0 %v1237
        %v2508 = vpop.f32.mrf.mxu0
        %v2509 = vadd.f32 0.0, %v2508
        %v2510 = vpop.f32.mrf.mxu0
        %v2511 = vadd.f32 0.0, %v2510
        %2512 = vmatmul.bf16.gmra.mxu0 %v1239
        %v2513 = vpop.f32.mrf.mxu0
        %v2514 = vadd.f32 0.0, %v2513
        %v2515 = vpop.f32.mrf.mxu0
        %v2516 = vadd.f32 0.0, %v2515
        %2517 = vmatmul.bf16.gmra.mxu0 %v1241
        %v2518 = vpop.f32.mrf.mxu0
        %v2519 = vadd.f32 0.0, %v2518
        %v2520 = vpop.f32.mrf.mxu0
        %v2521 = vadd.f32 0.0, %v2520
        %2522 = vdwg.mxu0
        %2523 = vmatpush.bf16.msra.mxu0 %v2440
        %2524 = vmatpush.bf16.msra.mxu0 %v2438
        %2525 = vmatpush.bf16.msra.mxu0 %v2436
        %2526 = vmatpush.bf16.msra.mxu0 %v2434
        %2527 = vmatpush.bf16.msra.mxu0 %v2432
        %2528 = vmatpush.bf16.msra.mxu0 %v2430
        %2529 = vmatpush.bf16.msra.mxu0 %v2428
        %2530 = vmatpush.bf16.msra.mxu0 %v2426
        %2531 = vmatmul.bf16.gmra.mxu0 %v1228
        %v2532 = vpop.f32.mrf.mxu0
        %v2533 = vadd.f32 %v2484, %v2532
        %v2534 = vpop.f32.mrf.mxu0
        %v2535 = vadd.f32 %v2486, %v2534
        %2536 = vmatmul.bf16.gmra.mxu0 %v1230
        %v2537 = vpop.f32.mrf.mxu0
        %v2538 = vadd.f32 %v2489, %v2537
        %v2539 = vpop.f32.mrf.mxu0
        %v2540 = vadd.f32 %v2491, %v2539
        %2541 = vmatmul.bf16.gmra.mxu0 %v1232
        %v2542 = vpop.f32.mrf.mxu0
        %v2543 = vadd.f32 %v2494, %v2542
        %v2544 = vpop.f32.mrf.mxu0
        %v2545 = vadd.f32 %v2496, %v2544
        %2546 = vmatmul.bf16.gmra.mxu0 %v1234
        %v2547 = vpop.f32.mrf.mxu0
        %v2548 = vadd.f32 %v2499, %v2547
        %v2549 = vpop.f32.mrf.mxu0
        %v2550 = vadd.f32 %v2501, %v2549
        %2551 = vmatmul.bf16.gmra.mxu0 %v1236
        %v2552 = vpop.f32.mrf.mxu0
        %v2553 = vadd.f32 %v2504, %v2552
        %v2554 = vpop.f32.mrf.mxu0
        %v2555 = vadd.f32 %v2506, %v2554
        %2556 = vmatmul.bf16.gmra.mxu0 %v1238
        %v2557 = vpop.f32.mrf.mxu0
        %v2558 = vadd.f32 %v2509, %v2557
        %v2559 = vpop.f32.mrf.mxu0
        %v2560 = vadd.f32 %v2511, %v2559
        %2561 = vmatmul.bf16.gmra.mxu0 %v1240
        %v2562 = vpop.f32.mrf.mxu0
        %v2563 = vadd.f32 %v2514, %v2562
        %v2564 = vpop.f32.mrf.mxu0
        %v2565 = vadd.f32 %v2516, %v2564
        %2566 = vmatmul.bf16.gmra.mxu0 %v1242
        %v2567 = vpop.f32.mrf.mxu0
        %v2568 = vadd.f32 %v2519, %v2567
        %v2569 = vpop.f32.mrf.mxu0
        %v2570 = vadd.f32 %v2521, %v2569
        %2571 = vdwg.mxu0
        %2572 = vmatpush.bf16.msra.mxu0 %v2425
        %2573 = vmatpush.bf16.msra.mxu0 %v2423
        %2574 = vmatpush.bf16.msra.mxu0 %v2421
        %2575 = vmatpush.bf16.msra.mxu0 %v2419
        %2576 = vmatpush.bf16.msra.mxu0 %v2417
        %2577 = vmatpush.bf16.msra.mxu0 %v2415
        %2578 = vmatpush.bf16.msra.mxu0 %v2413
        %2579 = vmatpush.bf16.msra.mxu0 %v2411
        %2580 = vmatmul.bf16.gmra.mxu0 %v1227
        %v2581 = vpop.f32.mrf.mxu0
        %v2582 = vadd.f32 0.0, %v2581
        %v2583 = vpop.f32.mrf.mxu0
        %v2584 = vadd.f32 0.0, %v2583
        %2585 = vmatmul.bf16.gmra.mxu0 %v1229
        %v2586 = vpop.f32.mrf.mxu0
        %v2587 = vadd.f32 0.0, %v2586
        %v2588 = vpop.f32.mrf.mxu0
        %v2589 = vadd.f32 0.0, %v2588
        %2590 = vmatmul.bf16.gmra.mxu0 %v1231
        %v2591 = vpop.f32.mrf.mxu0
        %v2592 = vadd.f32 0.0, %v2591
        %v2593 = vpop.f32.mrf.mxu0
        %v2594 = vadd.f32 0.0, %v2593
        %2595 = vmatmul.bf16.gmra.mxu0 %v1233
        %v2596 = vpop.f32.mrf.mxu0
        %v2597 = vadd.f32 0.0, %v2596
        %v2598 = vpop.f32.mrf.mxu0
        %v2599 = vadd.f32 0.0, %v2598
        %2600 = vmatmul.bf16.gmra.mxu0 %v1235
        %v2601 = vpop.f32.mrf.mxu0
        %v2602 = vadd.f32 0.0, %v2601
        %v2603 = vpop.f32.mrf.mxu0
        %v2604 = vadd.f32 0.0, %v2603
        %2605 = vmatmul.bf16.gmra.mxu0 %v1237
        %v2606 = vpop.f32.mrf.mxu0
        %v2607 = vadd.f32 0.0, %v2606
        %v2608 = vpop.f32.mrf.mxu0
        %v2609 = vadd.f32 0.0, %v2608
        %2610 = vmatmul.bf16.gmra.mxu0 %v1239
        %v2611 = vpop.f32.mrf.mxu0
        %v2612 = vadd.f32 0.0, %v2611
        %v2613 = vpop.f32.mrf.mxu0
        %v2614 = vadd.f32 0.0, %v2613
        %2615 = vmatmul.bf16.gmra.mxu0 %v1241
        %v2616 = vpop.f32.mrf.mxu0
        %v2617 = vadd.f32 0.0, %v2616
        %v2618 = vpop.f32.mrf.mxu0
        %v2619 = vadd.f32 0.0, %v2618
        %2620 = vdwg.mxu0
        %2621 = vmatpush.bf16.msra.mxu0 %v2441
        %2622 = vmatpush.bf16.msra.mxu0 %v2439
        %2623 = vmatpush.bf16.msra.mxu0 %v2437
        %2624 = vmatpush.bf16.msra.mxu0 %v2435
        %2625 = vmatpush.bf16.msra.mxu0 %v2433
        %2626 = vmatpush.bf16.msra.mxu0 %v2431
        %2627 = vmatpush.bf16.msra.mxu0 %v2429
        %2628 = vmatpush.bf16.msra.mxu0 %v2427
        %2629 = vmatmul.bf16.gmra.mxu0 %v1228
        %v2630 = vpop.f32.mrf.mxu0
        %v2631 = vadd.f32 %v2582, %v2630
        %v2632 = vpop.f32.mrf.mxu0
        %v2633 = vadd.f32 %v2584, %v2632
        %2634 = vmatmul.bf16.gmra.mxu0 %v1230
        %v2635 = vpop.f32.mrf.mxu0
        %v2636 = vadd.f32 %v2587, %v2635
        %v2637 = vpop.f32.mrf.mxu0
        %v2638 = vadd.f32 %v2589, %v2637
        %2639 = vmatmul.bf16.gmra.mxu0 %v1232
        %v2640 = vpop.f32.mrf.mxu0
        %v2641 = vadd.f32 %v2592, %v2640
        %v2642 = vpop.f32.mrf.mxu0
        %v2643 = vadd.f32 %v2594, %v2642
        %2644 = vmatmul.bf16.gmra.mxu0 %v1234
        %v2645 = vpop.f32.mrf.mxu0
        %v2646 = vadd.f32 %v2597, %v2645
        %v2647 = vpop.f32.mrf.mxu0
        %v2648 = vadd.f32 %v2599, %v2647
        %2649 = vmatmul.bf16.gmra.mxu0 %v1236
        %v2650 = vpop.f32.mrf.mxu0
        %v2651 = vadd.f32 %v2602, %v2650
        %v2652 = vpop.f32.mrf.mxu0
        %v2653 = vadd.f32 %v2604, %v2652
        %2654 = vmatmul.bf16.gmra.mxu0 %v1238
        %v2655 = vpop.f32.mrf.mxu0
        %v2656 = vadd.f32 %v2607, %v2655
        %v2657 = vpop.f32.mrf.mxu0
        %v2658 = vadd.f32 %v2609, %v2657
        %2659 = vmatmul.bf16.gmra.mxu0 %v1240
        %v2660 = vpop.f32.mrf.mxu0
        %v2661 = vadd.f32 %v2612, %v2660
        %v2662 = vpop.f32.mrf.mxu0
        %v2663 = vadd.f32 %v2614, %v2662
        %2664 = vmatmul.bf16.gmra.mxu0 %v1242
        %v2665 = vpop.f32.mrf.mxu0
        %v2666 = vadd.f32 %v2617, %v2665
        %v2667 = vpop.f32.mrf.mxu0
        %v2668 = vadd.f32 %v2619, %v2667
        %2669 = vdwg.mxu0
        %v2670 = vadd.f32 %v2144, %v2533
        %v2671 = vadd.f32 %v2242, %v2631
        %v2672 = vadd.f32 %v2146, %v2535
        %v2673 = vadd.f32 %v2244, %v2633
        %v2674 = vadd.f32 %v2149, %v2538
        %v2675 = vadd.f32 %v2247, %v2636
        %v2676 = vadd.f32 %v2151, %v2540
        %v2677 = vadd.f32 %v2249, %v2638
        %v2678 = vadd.f32 %v2154, %v2543
        %v2679 = vadd.f32 %v2252, %v2641
        %v2680 = vadd.f32 %v2156, %v2545
        %v2681 = vadd.f32 %v2254, %v2643
        %v2682 = vadd.f32 %v2159, %v2548
        %v2683 = vadd.f32 %v2257, %v2646
        %v2684 = vadd.f32 %v2161, %v2550
        %v2685 = vadd.f32 %v2259, %v2648
        %v2686 = vadd.f32 %v2164, %v2553
        %v2687 = vadd.f32 %v2262, %v2651
        %v2688 = vadd.f32 %v2166, %v2555
        %v2689 = vadd.f32 %v2264, %v2653
        %v2690 = vadd.f32 %v2169, %v2558
        %v2691 = vadd.f32 %v2267, %v2656
        %v2692 = vadd.f32 %v2171, %v2560
        %v2693 = vadd.f32 %v2269, %v2658
        %v2694 = vadd.f32 %v2174, %v2563
        %v2695 = vadd.f32 %v2272, %v2661
        %v2696 = vadd.f32 %v2176, %v2565
        %v2697 = vadd.f32 %v2274, %v2663
        %v2698 = vadd.f32 %v2179, %v2568
        %v2699 = vadd.f32 %v2277, %v2666
        %v2700 = vadd.f32 %v2181, %v2570
        %v2701 = vadd.f32 %v2279, %v2668
        %s2702 = scalar_lea.vmem [#allocation2], 768
        %v2703 = vld [vmem:[%s2702] sm:$0xff]
        %v2704 = vld [vmem:[%s2702 + $0x8] sm:$0xff]
        %v2705 = vld [vmem:[%s2702 + $0x10] sm:$0xff]
        %v2706 = vld [vmem:[%s2702 + $0x18] sm:$0xff]
        %v2707 = vld [vmem:[%s2702 + $0x20] sm:$0xff]
        %v2708 = vld [vmem:[%s2702 + $0x28] sm:$0xff]
        %v2709 = vld [vmem:[%s2702 + $0x30] sm:$0xff]
        %v2710 = vld [vmem:[%s2702 + $0x38] sm:$0xff]
        %v2711 = vld [vmem:[%s2702 + $0x40] sm:$0xff]
        %v2712 = vld [vmem:[%s2702 + $0x48] sm:$0xff]
        %v2713 = vld [vmem:[%s2702 + $0x50] sm:$0xff]
        %v2714 = vld [vmem:[%s2702 + $0x58] sm:$0xff]
        %v2715 = vld [vmem:[%s2702 + $0x60] sm:$0xff]
        %v2716 = vld [vmem:[%s2702 + $0x68] sm:$0xff]
        %v2717 = vld [vmem:[%s2702 + $0x70] sm:$0xff]
        %v2718 = vld [vmem:[%s2702 + $0x78] sm:$0xff]
        %v2719 = vld [vmem:[%s2702 + $0x80] sm:$0xff]
        %v2720 = vld [vmem:[%s2702 + $0x88] sm:$0xff]
        %v2721 = vld [vmem:[%s2702 + $0x90] sm:$0xff]
        %v2722 = vld [vmem:[%s2702 + $0x98] sm:$0xff]
        %v2723 = vld [vmem:[%s2702 + $0xa0] sm:$0xff]
        %v2724 = vld [vmem:[%s2702 + $0xa8] sm:$0xff]
        %v2725 = vld [vmem:[%s2702 + $0xb0] sm:$0xff]
        %v2726 = vld [vmem:[%s2702 + $0xb8] sm:$0xff]
        %v2727 = vld [vmem:[%s2702 + $0xc0] sm:$0xff]
        %v2728 = vld [vmem:[%s2702 + $0xc8] sm:$0xff]
        %v2729 = vld [vmem:[%s2702 + $0xd0] sm:$0xff]
        %v2730 = vld [vmem:[%s2702 + $0xd8] sm:$0xff]
        %v2731 = vld [vmem:[%s2702 + $0xe0] sm:$0xff]
        %v2732 = vld [vmem:[%s2702 + $0xe8] sm:$0xff]
        %v2733 = vld [vmem:[%s2702 + $0xf0] sm:$0xff]
        %v2734 = vld [vmem:[%s2702 + $0xf8] sm:$0xff]
        %v2767 = vunpack.c.l.b16 %v2703
        %v2768 = vunpack.c.h.b16 %v2703
        %v2769 = vunpack.c.l.b16 %v2704
        %v2770 = vunpack.c.h.b16 %v2704
        %v2771 = vunpack.c.l.b16 %v2705
        %v2772 = vunpack.c.h.b16 %v2705
        %v2773 = vunpack.c.l.b16 %v2706
        %v2774 = vunpack.c.h.b16 %v2706
        %v2775 = vunpack.c.l.b16 %v2707
        %v2776 = vunpack.c.h.b16 %v2707
        %v2777 = vunpack.c.l.b16 %v2708
        %v2778 = vunpack.c.h.b16 %v2708
        %v2779 = vunpack.c.l.b16 %v2709
        %v2780 = vunpack.c.h.b16 %v2709
        %v2781 = vunpack.c.l.b16 %v2710
        %v2782 = vunpack.c.h.b16 %v2710
        %v2783 = vunpack.c.l.b16 %v2711
        %v2784 = vunpack.c.h.b16 %v2711
        %v2785 = vunpack.c.l.b16 %v2712
        %v2786 = vunpack.c.h.b16 %v2712
        %v2787 = vunpack.c.l.b16 %v2713
        %v2788 = vunpack.c.h.b16 %v2713
        %v2789 = vunpack.c.l.b16 %v2714
        %v2790 = vunpack.c.h.b16 %v2714
        %v2791 = vunpack.c.l.b16 %v2715
        %v2792 = vunpack.c.h.b16 %v2715
        %v2793 = vunpack.c.l.b16 %v2716
        %v2794 = vunpack.c.h.b16 %v2716
        %v2795 = vunpack.c.l.b16 %v2717
        %v2796 = vunpack.c.h.b16 %v2717
        %v2797 = vunpack.c.l.b16 %v2718
        %v2798 = vunpack.c.h.b16 %v2718
        %v2799 = vunpack.c.l.b16 %v2719
        %v2800 = vunpack.c.h.b16 %v2719
        %v2801 = vunpack.c.l.b16 %v2720
        %v2802 = vunpack.c.h.b16 %v2720
        %v2803 = vunpack.c.l.b16 %v2721
        %v2804 = vunpack.c.h.b16 %v2721
        %v2805 = vunpack.c.l.b16 %v2722
        %v2806 = vunpack.c.h.b16 %v2722
        %v2807 = vunpack.c.l.b16 %v2723
        %v2808 = vunpack.c.h.b16 %v2723
        %v2809 = vunpack.c.l.b16 %v2724
        %v2810 = vunpack.c.h.b16 %v2724
        %v2811 = vunpack.c.l.b16 %v2725
        %v2812 = vunpack.c.h.b16 %v2725
        %v2813 = vunpack.c.l.b16 %v2726
        %v2814 = vunpack.c.h.b16 %v2726
        %v2815 = vunpack.c.l.b16 %v2727
        %v2816 = vunpack.c.h.b16 %v2727
        %v2817 = vunpack.c.l.b16 %v2728
        %v2818 = vunpack.c.h.b16 %v2728
        %v2819 = vunpack.c.l.b16 %v2729
        %v2820 = vunpack.c.h.b16 %v2729
        %v2821 = vunpack.c.l.b16 %v2730
        %v2822 = vunpack.c.h.b16 %v2730
        %v2823 = vunpack.c.l.b16 %v2731
        %v2824 = vunpack.c.h.b16 %v2731
        %v2825 = vunpack.c.l.b16 %v2732
        %v2826 = vunpack.c.h.b16 %v2732
        %v2827 = vunpack.c.l.b16 %v2733
        %v2828 = vunpack.c.h.b16 %v2733
        %v2829 = vunpack.c.l.b16 %v2734
        %v2830 = vunpack.c.h.b16 %v2734
        %v2831 = vpack.c.b16 %v2769, %v2767
        %v2832 = vpack.c.b16 %v2770, %v2768
        %v2833 = vpack.c.b16 %v2773, %v2771
        %v2834 = vpack.c.b16 %v2774, %v2772
        %v2835 = vpack.c.b16 %v2777, %v2775
        %v2836 = vpack.c.b16 %v2778, %v2776
        %v2837 = vpack.c.b16 %v2781, %v2779
        %v2838 = vpack.c.b16 %v2782, %v2780
        %v2839 = vpack.c.b16 %v2785, %v2783
        %v2840 = vpack.c.b16 %v2786, %v2784
        %v2841 = vpack.c.b16 %v2789, %v2787
        %v2842 = vpack.c.b16 %v2790, %v2788
        %v2843 = vpack.c.b16 %v2793, %v2791
        %v2844 = vpack.c.b16 %v2794, %v2792
        %v2845 = vpack.c.b16 %v2797, %v2795
        %v2846 = vpack.c.b16 %v2798, %v2796
        %v2847 = vpack.c.b16 %v2801, %v2799
        %v2848 = vpack.c.b16 %v2802, %v2800
        %v2849 = vpack.c.b16 %v2805, %v2803
        %v2850 = vpack.c.b16 %v2806, %v2804
        %v2851 = vpack.c.b16 %v2809, %v2807
        %v2852 = vpack.c.b16 %v2810, %v2808
        %v2853 = vpack.c.b16 %v2813, %v2811
        %v2854 = vpack.c.b16 %v2814, %v2812
        %v2855 = vpack.c.b16 %v2817, %v2815
        %v2856 = vpack.c.b16 %v2818, %v2816
        %v2857 = vpack.c.b16 %v2821, %v2819
        %v2858 = vpack.c.b16 %v2822, %v2820
        %v2859 = vpack.c.b16 %v2825, %v2823
        %v2860 = vpack.c.b16 %v2826, %v2824
        %v2861 = vpack.c.b16 %v2829, %v2827
        %v2862 = vpack.c.b16 %v2830, %v2828
        %2895 = vmatpush.bf16.msra.mxu0 %v2845
        %2896 = vmatpush.bf16.msra.mxu0 %v2843
        %2897 = vmatpush.bf16.msra.mxu0 %v2841
        %2898 = vmatpush.bf16.msra.mxu0 %v2839
        %2899 = vmatpush.bf16.msra.mxu0 %v2837
        %2900 = vmatpush.bf16.msra.mxu0 %v2835
        %2901 = vmatpush.bf16.msra.mxu0 %v2833
        %2902 = vmatpush.bf16.msra.mxu0 %v2831
        %2903 = vmatmul.bf16.gmra.mxu0 %v1488
        %v2904 = vpop.f32.mrf.mxu0
        %v2905 = vadd.f32 0.0, %v2904
        %v2906 = vpop.f32.mrf.mxu0
        %v2907 = vadd.f32 0.0, %v2906
        %2908 = vmatmul.bf16.gmra.mxu0 %v1490
        %v2909 = vpop.f32.mrf.mxu0
        %v2910 = vadd.f32 0.0, %v2909
        %v2911 = vpop.f32.mrf.mxu0
        %v2912 = vadd.f32 0.0, %v2911
        %2913 = vmatmul.bf16.gmra.mxu0 %v1492
        %v2914 = vpop.f32.mrf.mxu0
        %v2915 = vadd.f32 0.0, %v2914
        %v2916 = vpop.f32.mrf.mxu0
        %v2917 = vadd.f32 0.0, %v2916
        %2918 = vmatmul.bf16.gmra.mxu0 %v1494
        %v2919 = vpop.f32.mrf.mxu0
        %v2920 = vadd.f32 0.0, %v2919
        %v2921 = vpop.f32.mrf.mxu0
        %v2922 = vadd.f32 0.0, %v2921
        %2923 = vmatmul.bf16.gmra.mxu0 %v1496
        %v2924 = vpop.f32.mrf.mxu0
        %v2925 = vadd.f32 0.0, %v2924
        %v2926 = vpop.f32.mrf.mxu0
        %v2927 = vadd.f32 0.0, %v2926
        %2928 = vmatmul.bf16.gmra.mxu0 %v1498
        %v2929 = vpop.f32.mrf.mxu0
        %v2930 = vadd.f32 0.0, %v2929
        %v2931 = vpop.f32.mrf.mxu0
        %v2932 = vadd.f32 0.0, %v2931
        %2933 = vmatmul.bf16.gmra.mxu0 %v1500
        %v2934 = vpop.f32.mrf.mxu0
        %v2935 = vadd.f32 0.0, %v2934
        %v2936 = vpop.f32.mrf.mxu0
        %v2937 = vadd.f32 0.0, %v2936
        %2938 = vmatmul.bf16.gmra.mxu0 %v1502
        %v2939 = vpop.f32.mrf.mxu0
        %v2940 = vadd.f32 0.0, %v2939
        %v2941 = vpop.f32.mrf.mxu0
        %v2942 = vadd.f32 0.0, %v2941
        %2943 = vdwg.mxu0
        %2944 = vmatpush.bf16.msra.mxu0 %v2861
        %2945 = vmatpush.bf16.msra.mxu0 %v2859
        %2946 = vmatpush.bf16.msra.mxu0 %v2857
        %2947 = vmatpush.bf16.msra.mxu0 %v2855
        %2948 = vmatpush.bf16.msra.mxu0 %v2853
        %2949 = vmatpush.bf16.msra.mxu0 %v2851
        %2950 = vmatpush.bf16.msra.mxu0 %v2849
        %2951 = vmatpush.bf16.msra.mxu0 %v2847
        %2952 = vmatmul.bf16.gmra.mxu0 %v1489
        %v2953 = vpop.f32.mrf.mxu0
        %v2954 = vadd.f32 %v2905, %v2953
        %v2955 = vpop.f32.mrf.mxu0
        %v2956 = vadd.f32 %v2907, %v2955
        %2957 = vmatmul.bf16.gmra.mxu0 %v1491
        %v2958 = vpop.f32.mrf.mxu0
        %v2959 = vadd.f32 %v2910, %v2958
        %v2960 = vpop.f32.mrf.mxu0
        %v2961 = vadd.f32 %v2912, %v2960
        %2962 = vmatmul.bf16.gmra.mxu0 %v1493
        %v2963 = vpop.f32.mrf.mxu0
        %v2964 = vadd.f32 %v2915, %v2963
        %v2965 = vpop.f32.mrf.mxu0
        %v2966 = vadd.f32 %v2917, %v2965
        %2967 = vmatmul.bf16.gmra.mxu0 %v1495
        %v2968 = vpop.f32.mrf.mxu0
        %v2969 = vadd.f32 %v2920, %v2968
        %v2970 = vpop.f32.mrf.mxu0
        %v2971 = vadd.f32 %v2922, %v2970
        %2972 = vmatmul.bf16.gmra.mxu0 %v1497
        %v2973 = vpop.f32.mrf.mxu0
        %v2974 = vadd.f32 %v2925, %v2973
        %v2975 = vpop.f32.mrf.mxu0
        %v2976 = vadd.f32 %v2927, %v2975
        %2977 = vmatmul.bf16.gmra.mxu0 %v1499
        %v2978 = vpop.f32.mrf.mxu0
        %v2979 = vadd.f32 %v2930, %v2978
        %v2980 = vpop.f32.mrf.mxu0
        %v2981 = vadd.f32 %v2932, %v2980
        %2982 = vmatmul.bf16.gmra.mxu0 %v1501
        %v2983 = vpop.f32.mrf.mxu0
        %v2984 = vadd.f32 %v2935, %v2983
        %v2985 = vpop.f32.mrf.mxu0
        %v2986 = vadd.f32 %v2937, %v2985
        %2987 = vmatmul.bf16.gmra.mxu0 %v1503
        %v2988 = vpop.f32.mrf.mxu0
        %v2989 = vadd.f32 %v2940, %v2988
        %v2990 = vpop.f32.mrf.mxu0
        %v2991 = vadd.f32 %v2942, %v2990
        %2992 = vdwg.mxu0
        %2993 = vmatpush.bf16.msra.mxu0 %v2846
        %2994 = vmatpush.bf16.msra.mxu0 %v2844
        %2995 = vmatpush.bf16.msra.mxu0 %v2842
        %2996 = vmatpush.bf16.msra.mxu0 %v2840
        %2997 = vmatpush.bf16.msra.mxu0 %v2838
        %2998 = vmatpush.bf16.msra.mxu0 %v2836
        %2999 = vmatpush.bf16.msra.mxu0 %v2834
        %3000 = vmatpush.bf16.msra.mxu0 %v2832
        %3001 = vmatmul.bf16.gmra.mxu0 %v1488
        %v3002 = vpop.f32.mrf.mxu0
        %v3003 = vadd.f32 0.0, %v3002
        %v3004 = vpop.f32.mrf.mxu0
        %v3005 = vadd.f32 0.0, %v3004
        %3006 = vmatmul.bf16.gmra.mxu0 %v1490
        %v3007 = vpop.f32.mrf.mxu0
        %v3008 = vadd.f32 0.0, %v3007
        %v3009 = vpop.f32.mrf.mxu0
        %v3010 = vadd.f32 0.0, %v3009
        %3011 = vmatmul.bf16.gmra.mxu0 %v1492
        %v3012 = vpop.f32.mrf.mxu0
        %v3013 = vadd.f32 0.0, %v3012
        %v3014 = vpop.f32.mrf.mxu0
        %v3015 = vadd.f32 0.0, %v3014
        %3016 = vmatmul.bf16.gmra.mxu0 %v1494
        %v3017 = vpop.f32.mrf.mxu0
        %v3018 = vadd.f32 0.0, %v3017
        %v3019 = vpop.f32.mrf.mxu0
        %v3020 = vadd.f32 0.0, %v3019
        %3021 = vmatmul.bf16.gmra.mxu0 %v1496
        %v3022 = vpop.f32.mrf.mxu0
        %v3023 = vadd.f32 0.0, %v3022
        %v3024 = vpop.f32.mrf.mxu0
        %v3025 = vadd.f32 0.0, %v3024
        %3026 = vmatmul.bf16.gmra.mxu0 %v1498
        %v3027 = vpop.f32.mrf.mxu0
        %v3028 = vadd.f32 0.0, %v3027
        %v3029 = vpop.f32.mrf.mxu0
        %v3030 = vadd.f32 0.0, %v3029
        %3031 = vmatmul.bf16.gmra.mxu0 %v1500
        %v3032 = vpop.f32.mrf.mxu0
        %v3033 = vadd.f32 0.0, %v3032
        %v3034 = vpop.f32.mrf.mxu0
        %v3035 = vadd.f32 0.0, %v3034
        %3036 = vmatmul.bf16.gmra.mxu0 %v1502
        %v3037 = vpop.f32.mrf.mxu0
        %v3038 = vadd.f32 0.0, %v3037
        %v3039 = vpop.f32.mrf.mxu0
        %v3040 = vadd.f32 0.0, %v3039
        %3041 = vdwg.mxu0
        %3042 = vmatpush.bf16.msra.mxu0 %v2862
        %3043 = vmatpush.bf16.msra.mxu0 %v2860
        %3044 = vmatpush.bf16.msra.mxu0 %v2858
        %3045 = vmatpush.bf16.msra.mxu0 %v2856
        %3046 = vmatpush.bf16.msra.mxu0 %v2854
        %3047 = vmatpush.bf16.msra.mxu0 %v2852
        %3048 = vmatpush.bf16.msra.mxu0 %v2850
        %3049 = vmatpush.bf16.msra.mxu0 %v2848
        %3050 = vmatmul.bf16.gmra.mxu0 %v1489
        %v3051 = vpop.f32.mrf.mxu0
        %v3052 = vadd.f32 %v3003, %v3051
        %v3053 = vpop.f32.mrf.mxu0
        %v3054 = vadd.f32 %v3005, %v3053
        %3055 = vmatmul.bf16.gmra.mxu0 %v1491
        %v3056 = vpop.f32.mrf.mxu0
        %v3057 = vadd.f32 %v3008, %v3056
        %v3058 = vpop.f32.mrf.mxu0
        %v3059 = vadd.f32 %v3010, %v3058
        %3060 = vmatmul.bf16.gmra.mxu0 %v1493
        %v3061 = vpop.f32.mrf.mxu0
        %v3062 = vadd.f32 %v3013, %v3061
        %v3063 = vpop.f32.mrf.mxu0
        %v3064 = vadd.f32 %v3015, %v3063
        %3065 = vmatmul.bf16.gmra.mxu0 %v1495
        %v3066 = vpop.f32.mrf.mxu0
        %v3067 = vadd.f32 %v3018, %v3066
        %v3068 = vpop.f32.mrf.mxu0
        %v3069 = vadd.f32 %v3020, %v3068
        %3070 = vmatmul.bf16.gmra.mxu0 %v1497
        %v3071 = vpop.f32.mrf.mxu0
        %v3072 = vadd.f32 %v3023, %v3071
        %v3073 = vpop.f32.mrf.mxu0
        %v3074 = vadd.f32 %v3025, %v3073
        %3075 = vmatmul.bf16.gmra.mxu0 %v1499
        %v3076 = vpop.f32.mrf.mxu0
        %v3077 = vadd.f32 %v3028, %v3076
        %v3078 = vpop.f32.mrf.mxu0
        %v3079 = vadd.f32 %v3030, %v3078
        %3080 = vmatmul.bf16.gmra.mxu0 %v1501
        %v3081 = vpop.f32.mrf.mxu0
        %v3082 = vadd.f32 %v3033, %v3081
        %v3083 = vpop.f32.mrf.mxu0
        %v3084 = vadd.f32 %v3035, %v3083
        %3085 = vmatmul.bf16.gmra.mxu0 %v1503
        %v3086 = vpop.f32.mrf.mxu0
        %v3087 = vadd.f32 %v3038, %v3086
        %v3088 = vpop.f32.mrf.mxu0
        %v3089 = vadd.f32 %v3040, %v3088
        %3090 = vdwg.mxu0
        %v3091 = vadd.f32 %v2670, %v2954
        %v3092 = vadd.f32 %v2671, %v3052
        %v3093 = vadd.f32 %v2672, %v2956
        %v3094 = vadd.f32 %v2673, %v3054
        %v3095 = vadd.f32 %v2674, %v2959
        %v3096 = vadd.f32 %v2675, %v3057
        %v3097 = vadd.f32 %v2676, %v2961
        %v3098 = vadd.f32 %v2677, %v3059
        %v3099 = vadd.f32 %v2678, %v2964
        %v3100 = vadd.f32 %v2679, %v3062
        %v3101 = vadd.f32 %v2680, %v2966
        %v3102 = vadd.f32 %v2681, %v3064
        %v3103 = vadd.f32 %v2682, %v2969
        %v3104 = vadd.f32 %v2683, %v3067
        %v3105 = vadd.f32 %v2684, %v2971
        %v3106 = vadd.f32 %v2685, %v3069
        %v3107 = vadd.f32 %v2686, %v2974
        %v3108 = vadd.f32 %v2687, %v3072
        %v3109 = vadd.f32 %v2688, %v2976
        %v3110 = vadd.f32 %v2689, %v3074
        %v3111 = vadd.f32 %v2690, %v2979
        %v3112 = vadd.f32 %v2691, %v3077
        %v3113 = vadd.f32 %v2692, %v2981
        %v3114 = vadd.f32 %v2693, %v3079
        %v3115 = vadd.f32 %v2694, %v2984
        %v3116 = vadd.f32 %v2695, %v3082
        %v3117 = vadd.f32 %v2696, %v2986
        %v3118 = vadd.f32 %v2697, %v3084
        %v3119 = vadd.f32 %v2698, %v2989
        %v3120 = vadd.f32 %v2699, %v3087
        %v3121 = vadd.f32 %v2700, %v2991
        %v3122 = vadd.f32 %v2701, %v3089
        %v3123 = vld [vmem:[%s502] sm:$0x3]
        %v3125 = vperm.slane %v3123, 0
        %v3126 = vperm.slane %v3123, 1
        %v3129 = vadd.f32 %v3091, %v3125
        %v3130 = vadd.f32 %v3092, %v3126
        %v3131 = vadd.f32 %v3093, %v3125
        %v3132 = vadd.f32 %v3094, %v3126
        %v3133 = vadd.f32 %v3095, %v3125
        %v3134 = vadd.f32 %v3096, %v3126
        %v3135 = vadd.f32 %v3097, %v3125
        %v3136 = vadd.f32 %v3098, %v3126
        %v3137 = vadd.f32 %v3099, %v3125
        %v3138 = vadd.f32 %v3100, %v3126
        %v3139 = vadd.f32 %v3101, %v3125
        %v3140 = vadd.f32 %v3102, %v3126
        %v3141 = vadd.f32 %v3103, %v3125
        %v3142 = vadd.f32 %v3104, %v3126
        %v3143 = vadd.f32 %v3105, %v3125
        %v3144 = vadd.f32 %v3106, %v3126
        %v3145 = vadd.f32 %v3107, %v3125
        %v3146 = vadd.f32 %v3108, %v3126
        %v3147 = vadd.f32 %v3109, %v3125
        %v3148 = vadd.f32 %v3110, %v3126
        %v3149 = vadd.f32 %v3111, %v3125
        %v3150 = vadd.f32 %v3112, %v3126
        %v3151 = vadd.f32 %v3113, %v3125
        %v3152 = vadd.f32 %v3114, %v3126
        %v3153 = vadd.f32 %v3115, %v3125
        %v3154 = vadd.f32 %v3116, %v3126
        %v3155 = vadd.f32 %v3117, %v3125
        %v3156 = vadd.f32 %v3118, %v3126
        %v3157 = vadd.f32 %v3119, %v3125
        %v3158 = vadd.f32 %v3120, %v3126
        %v3159 = vadd.f32 %v3121, %v3125
        %v3160 = vadd.f32 %v3122, %v3126
        %3161 = vst [vmem:[%s458] sm:$0xff] %v3129
        %3162 = vst [vmem:[%s458 + $0x8] sm:$0xff] %v3130
        %3163 = vst [vmem:[%s458 + $0x10] sm:$0xff] %v3131
        %3164 = vst [vmem:[%s458 + $0x18] sm:$0xff] %v3132
        %3165 = vst [vmem:[%s458 + $0x20] sm:$0xff] %v3133
        %3166 = vst [vmem:[%s458 + $0x28] sm:$0xff] %v3134
        %3167 = vst [vmem:[%s458 + $0x30] sm:$0xff] %v3135
        %3168 = vst [vmem:[%s458 + $0x38] sm:$0xff] %v3136
        %3169 = vst [vmem:[%s458 + $0x40] sm:$0xff] %v3137
        %3170 = vst [vmem:[%s458 + $0x48] sm:$0xff] %v3138
        %3171 = vst [vmem:[%s458 + $0x50] sm:$0xff] %v3139
        %3172 = vst [vmem:[%s458 + $0x58] sm:$0xff] %v3140
        %3173 = vst [vmem:[%s458 + $0x60] sm:$0xff] %v3141
        %3174 = vst [vmem:[%s458 + $0x68] sm:$0xff] %v3142
        %3175 = vst [vmem:[%s458 + $0x70] sm:$0xff] %v3143
        %3176 = vst [vmem:[%s458 + $0x78] sm:$0xff] %v3144
        %3177 = vst [vmem:[%s458 + $0x80] sm:$0xff] %v3145
        %3178 = vst [vmem:[%s458 + $0x88] sm:$0xff] %v3146
        %3179 = vst [vmem:[%s458 + $0x90] sm:$0xff] %v3147
        %3180 = vst [vmem:[%s458 + $0x98] sm:$0xff] %v3148
        %3181 = vst [vmem:[%s458 + $0xa0] sm:$0xff] %v3149
        %3182 = vst [vmem:[%s458 + $0xa8] sm:$0xff] %v3150
        %3183 = vst [vmem:[%s458 + $0xb0] sm:$0xff] %v3151
        %3184 = vst [vmem:[%s458 + $0xb8] sm:$0xff] %v3152
        %3185 = vst [vmem:[%s458 + $0xc0] sm:$0xff] %v3153
        %3186 = vst [vmem:[%s458 + $0xc8] sm:$0xff] %v3154
        %3187 = vst [vmem:[%s458 + $0xd0] sm:$0xff] %v3155
        %3188 = vst [vmem:[%s458 + $0xd8] sm:$0xff] %v3156
        %3189 = vst [vmem:[%s458 + $0xe0] sm:$0xff] %v3157
        %3190 = vst [vmem:[%s458 + $0xe8] sm:$0xff] %v3158
        %3191 = vst [vmem:[%s458 + $0xf0] sm:$0xff] %v3159
        %3192 = vst [vmem:[%s458 + $0xf8] sm:$0xff] %v3160
        %s3193 = sand.u32 %s268, 1
        %s3194 = scalar_lea.sflag [#allocation4], %s3193
        %s3195 = sand.u32 %s268, 1
        %s3196 = smul.addr %s3195, 256
        %s3197 = scalar_lea.vmem [#allocation5], %s3196
        // Predicated region
        $region61: #{tpu_custom_call.1} parent=55 // pred_check
          %p3198 = pneg %p278
        $region62: #{tpu_custom_call.1} parent=55 // pred_check_branch
          %3200 = sbr.rel (%p3198) target = $region64
        $region63: #{tpu_custom_call.1} parent=55 // pred_region
          %s3201 = smul.u32 16, %s29
          %3203 = vsyncadd %s3194, 0
          %s3204 = smul.addr %s3201, 2
          %s3205 = smul.addr %s28, 64
          %s3206 = sadd.s32 %s3204, %s3205
          %s3207 = smul.addr %s3206, 8
          %s3208 = scalar_lea.hbm %s9, %s3207
          %s3209 = sshll.u32 %s3197, 4
          %s3210 = int_to_ptr.vmem [resolvable:$true] %s3209
          %s3211 = sshll.u32 %s3208, 4
          %s3212 = int_to_ptr.hbm [resolvable:$true] %s3211
          %3217 = dma.vmem_to_hbm [thread:$0]  %s3210, 4096, %s3212, %s3194, 256, 256, 16
        $region64: #{tpu_custom_call.1} parent=55 // pred_fallthru
          _
      $region56: #{tpu_custom_call.1} parent=5 // pred_fallthru
        _
      %p3218 = scmp.le.s32.totalorder 2, %s19
      // Predicated region
      $region65: #{tpu_custom_call.1} parent=5 // pred_check
        %p3219 = pneg %p3218
      $region66: #{tpu_custom_call.1} parent=5 // pred_check_branch
        %3221 = sbr.rel (%p3219) target = $region68
      $region67: #{tpu_custom_call.1} parent=5 // pred_region
        %s3222 = ssub.s32 %s19, 2
        // Predicated region
        $region69: #{tpu_custom_call.1} parent=67 // pred_check
          %p3223 = pneg %p284
        $region70: #{tpu_custom_call.1} parent=67 // pred_check_branch
          %3225 = sbr.rel (%p3223) target = $region72
        $region71: #{tpu_custom_call.1} parent=67 // pred_region
          %s3226 = sand.u32 %s269, 1
          %s3227 = scalar_lea.sflag [#allocation4], %s3226
          %s3228 = sand.u32 %s269, 1
          %s3229 = smul.addr %s3228, 256
          %s3230 = scalar_lea.vmem [#allocation5], %s3229
          %3232 = dma.done %s3227, 4096
        $region72: #{tpu_custom_call.1} parent=67 // pred_fallthru
          _
      $region68: #{tpu_custom_call.1} parent=5 // pred_fallthru
        _
    $region6: #{tpu_custom_call.1} parent=1 // loop_footer
      %s23 = sadd.s32 1, %s19
    $region7: #{tpu_custom_call.1} parent=1 // loop_footer_branch
      %18 = sbr.rel target = $region3
    $region8: #{tpu_custom_call.1} parent=1 // loop_exit
      _
    %3233 = vsyncpa [#allocation3], 1
    %s3234 = scalar_lea.sflag [#allocation3], 1
    %3235 = vsyncpa %s3234, 1
    %3236 = vsyncpa [#allocation4], 1
    %s3237 = scalar_lea.sflag [#allocation4], 1
    %3238 = vsyncpa %s3237, 1

</llo_original>
